<compile_context>
chip_gen: v7x
topology: tpu7x:2x2x1
jax: 0.10.0
libtpu: 0.0.40
codegen_flags: <defaults>
</compile_context>

<pallas_src>
import jax
import jax.numpy as jnp
import numpy as np
from jax import lax
from jax.experimental import pallas as pl
from jax.experimental.pallas import tpu as pltpu


def _self_attn_kernel(gamma_ref,      # SMEM (1, 1) scalar gamma
                      x_ref,          # VMEM (C, N) f32   (batch dim squeezed)
                      m_ref,          # VMEM (C, C) bf16  M = Wq @ Wk^T
                      cvec_ref,       # VMEM (C, 1) f32   Wk @ bq^T
                      wvt_ref,        # VMEM (C, C) bf16  Wv^T  (out, in)
                      bv_ref,         # VMEM (C, 1) f32
                      out_ref):       # VMEM (C, N) f32
    x = x_ref[...]                                    # (C, N) f32
    xb = x.astype(jnp.bfloat16)
    xtb = x.T.astype(jnp.bfloat16)                    # (N, C) bf16

    # energy = X^T (M X) + c   (bf16 MXU operands, f32 accumulation)
    mx = jnp.dot(m_ref[...], xb, preferred_element_type=jnp.float32)     # (C, N)
    energy = jnp.dot(xtb, mx.astype(jnp.bfloat16),
                     preferred_element_type=jnp.float32)                 # (N, N)
    # key(column)-dependent bias term; row-only and constant bias terms cancel
    # under softmax over the last axis.
    c_row = jnp.sum(x * cvec_ref[...], axis=0, keepdims=True)            # (1, N)
    energy = energy + c_row

    # numerically-stable softmax over keys; stats in f32, EUP approx reciprocal
    e_max = jnp.max(energy, axis=-1, keepdims=True)
    p = jnp.exp(energy - e_max)
    attn = p * pl.reciprocal(jnp.sum(p, axis=-1, keepdims=True), approx=True)

    # value projection (C, N); out[c, n] = sum_m v[c, m] * attn[n, m]
    v = jnp.dot(wvt_ref[...], xb,
                preferred_element_type=jnp.float32) + bv_ref[...]        # (C, N)
    out = lax.dot_general(v.astype(jnp.bfloat16), attn.astype(jnp.bfloat16),
                          (((1,), (1,)), ((), ())),
                          preferred_element_type=jnp.float32)            # (C, N)

    out_ref[...] = gamma_ref[0, 0] * out + x


def self_attn_forward(x_nchw, params):
    """x_nchw: (B, C, W, H) float32. Returns (B, C, W, H)."""
    B, C, W, H = x_nchw.shape
    N = W * H

    # channels-first flattened spatial: a free reshape, no transposes
    x_bcn = x_nchw.reshape(B, C, N)

    wq, bq = params["wq"], params["bq"]      # (C, Cq), (1, Cq)
    wk = params["wk"]                        # (C, Cq)   (bk cancels in softmax)
    wv, bv = params["wv"], params["bv"]      # (C, C),  (1, C)
    gamma = params["gamma"]                  # (1, 1)

    # fold the q/k projections (done once, outside the kernel)
    m_fold = jnp.dot(wq, wk.T).astype(jnp.bfloat16)     # (C, C) bf16
    cvec = jnp.dot(wk, bq.T)                            # (C, 1) f32
    wvt = wv.T.astype(jnp.bfloat16)                     # (C, C) bf16
    bv_col = bv.T                                       # (C, 1) f32

    out_bcn = pl.pallas_call(
        _self_attn_kernel,
        out_shape=jax.ShapeDtypeStruct((B, C, N), jnp.float32),
        grid_spec=pltpu.PrefetchScalarGridSpec(
            num_scalar_prefetch=0,
            grid=(B,),
            in_specs=[
                # gamma lives in SMEM (scalar)
                pl.BlockSpec(memory_space=pltpu.MemorySpace.SMEM),
                # per-batch input tile (C, N), batch dim squeezed
                pl.BlockSpec((pl.Squeezed(), C, N), lambda b: (b, 0, 0)),
                # folded / transposed weights and biases (constant across grid)
                pl.BlockSpec((C, C), lambda b: (0, 0)),   # M = Wq Wk^T (bf16)
                pl.BlockSpec((C, 1), lambda b: (0, 0)),   # Wk bq^T
                pl.BlockSpec((C, C), lambda b: (0, 0)),   # Wv^T (bf16)
                pl.BlockSpec((C, 1), lambda b: (0, 0)),   # bv
            ],
            out_specs=pl.BlockSpec((pl.Squeezed(), C, N), lambda b: (b, 0, 0)),
        ),
        compiler_params=pltpu.CompilerParams(
            dimension_semantics=("parallel",)),
    )(gamma, x_bcn, m_fold, cvec, wvt, bv_col)

    return out_bcn.reshape(B, C, W, H)


def init_params(key, in_dim):
    """Deterministic synthetic params matching Self_Attn.__init__ shapes.
    Conv2d(in, out, 1) weight is (out, in, 1, 1); stored here as (in, out)."""
    Cq = in_dim // 8
    ks = jax.random.split(key, 6)
    scale = 1.0 / np.sqrt(in_dim)
    wq = jax.random.uniform(ks[0], (in_dim, Cq), jnp.float32, -scale, scale)
    bq = jax.random.uniform(ks[1], (1, Cq), jnp.float32, -scale, scale)
    wk = jax.random.uniform(ks[2], (in_dim, Cq), jnp.float32, -scale, scale)
    bk = jax.random.uniform(ks[3], (1, Cq), jnp.float32, -scale, scale)
    wv = jax.random.uniform(ks[4], (in_dim, in_dim), jnp.float32, -scale, scale)
    bv = jax.random.uniform(ks[5], (1, in_dim), jnp.float32, -scale, scale)
    gamma = jnp.zeros((1, 1), jnp.float32)   # nn.Parameter(torch.zeros(1))
    # TODO(synk): Self_Attn's avg_pool / max_pool / fc / sigmoid branches from
    # __init__ are unused in forward(), so they are intentionally not implemented.
    return dict(wq=wq, bq=bq, wk=wk, bk=bk, wv=wv, bv=bv, gamma=gamma)


def reference_forward(x_nchw, params):
    """Pure-JAX reference mirroring the PyTorch forward (no folding, full f32)."""
    B, C, W, H = x_nchw.shape
    N = W * H
    x_bnc = jnp.transpose(x_nchw.reshape(B, C, N), (0, 2, 1))      # (B, N, C)
    q = x_bnc @ params["wq"] + params["bq"]                         # (B, N, Cq)
    k = x_bnc @ params["wk"] + params["bk"]                         # (B, N, Cq)
    v = x_bnc @ params["wv"] + params["bv"]                         # (B, N, C)
    energy = jnp.einsum("bnd,bmd->bnm", q, k)                       # (B, N, N)
    attn = jax.nn.softmax(energy, axis=-1)
    out = jnp.einsum("bnm,bmc->bnc", attn, v)                       # (B, N, C)
    out = params["gamma"][0, 0] * out + x_bnc
    return jnp.transpose(out, (0, 2, 1)).reshape(B, C, W, H)


if __name__ == "__main__":
    B, C, W, H = 2, 32, 16, 16        # N = W*H = 256 (lane-dense), Cq = 4
    key = jax.random.PRNGKey(0)
    k_x, k_p = jax.random.split(key)
    x = jax.random.normal(k_x, (B, C, W, H), jnp.float32)
    params = init_params(k_p, C)

    # nonzero gamma so the attention path is actually exercised
    params["gamma"] = jnp.full((1, 1), 0.5, jnp.float32)

    out = jax.block_until_ready(self_attn_forward(x, params))
    ref = reference_forward(x, params)

    # bf16 MXU operands + approx reciprocal: slightly looser tolerance than f32
    np.testing.assert_allclose(np.asarray(out), np.asarray(ref),
                               rtol=2e-2, atol=2e-2)
    print("KERNEL_OK")
</pallas_src>

<mosaic_0001>
module attributes {stable_mosaic.version = 11 : i64} {
  func.func @_self_attn_kernel(%arg0: i32, %arg1: memref<1x1xf32, #tpu.memory_space<smem>>, %arg2: memref<1x32x256xf32, #tpu.memory_space<vmem>>, %arg3: memref<32x32xbf16, #tpu.memory_space<vmem>>, %arg4: memref<32x1xf32, #tpu.memory_space<vmem>>, %arg5: memref<32x32xbf16, #tpu.memory_space<vmem>>, %arg6: memref<32x1xf32, #tpu.memory_space<vmem>>, %arg7: memref<1x32x256xf32, #tpu.memory_space<vmem>>) attributes {dimension_semantics = [#tpu.dimension_semantics<parallel>], iteration_bounds = array<i64: 2>, scalar_prefetch = 0 : i64, scratch_operands = 0 : i64, tpu.core_type = #tpu.core_type<tc>, window_params = [{transform_indices = @transform_0, window_bounds = array<i64: 1, 1>}, {transform_indices = @transform_1, window_bounds = array<i64: 1, 32, 256>}, {pipeline_mode = #tpu.pipeline_mode<synchronous>, transform_indices = @transform_2, window_bounds = array<i64: 32, 32>}, {pipeline_mode = #tpu.pipeline_mode<synchronous>, transform_indices = @transform_3, window_bounds = array<i64: 32, 1>}, {pipeline_mode = #tpu.pipeline_mode<synchronous>, transform_indices = @transform_4, window_bounds = array<i64: 32, 32>}, {pipeline_mode = #tpu.pipeline_mode<synchronous>, transform_indices = @transform_5, window_bounds = array<i64: 32, 1>}, {transform_indices = @transform_6, window_bounds = array<i64: 1, 32, 256>}]} {
    %c0 = arith.constant 0 : index
    %c0_0 = arith.constant 0 : index
    %c0_1 = arith.constant 0 : index
    %0 = vector.load %arg2[%c0, %c0_0, %c0_1] : memref<1x32x256xf32, #tpu.memory_space<vmem>>, vector<1x32x256xf32>
    %1 = vector.shape_cast %0 : vector<1x32x256xf32> to vector<32x256xf32>
    %2 = arith.truncf %1 : vector<32x256xf32> to vector<32x256xbf16>
    %3 = tpu.transpose %1, [1, 0] : vector<32x256xf32> -> vector<256x32xf32>
    %4 = arith.truncf %3 : vector<256x32xf32> to vector<256x32xbf16>
    %c0_2 = arith.constant 0 : index
    %c0_3 = arith.constant 0 : index
    %5 = vector.load %arg3[%c0_2, %c0_3] : memref<32x32xbf16, #tpu.memory_space<vmem>>, vector<32x32xbf16>
    %cst = arith.constant dense<0.000000e+00> : vector<32x256xf32>
    %6 = tpu.matmul %5, %2, %cst {dimension_numbers = #tpu.dot_dimension_numbers<[1], [0], [0], [1], [0, 0, 1, 1], [], []>} : vector<32x32xbf16>, vector<32x256xbf16>, vector<32x256xf32> -> vector<32x256xf32>
    %7 = arith.truncf %6 : vector<32x256xf32> to vector<32x256xbf16>
    %cst_4 = arith.constant dense<0.000000e+00> : vector<256x256xf32>
    %8 = tpu.matmul %4, %7, %cst_4 {dimension_numbers = #tpu.dot_dimension_numbers<[1], [0], [0], [1], [0, 0, 1, 1], [], []>} : vector<256x32xbf16>, vector<32x256xbf16>, vector<256x256xf32> -> vector<256x256xf32>
    %c0_5 = arith.constant 0 : index
    %c0_6 = arith.constant 0 : index
    %9 = vector.load %arg4[%c0_5, %c0_6] : memref<32x1xf32, #tpu.memory_space<vmem>>, vector<32x1xf32>
    %10 = vector.broadcast %9 : vector<32x1xf32> to vector<32x256xf32>
    %11 = arith.mulf %1, %10 : vector<32x256xf32>
    %cst_7 = arith.constant dense<0.000000e+00> : vector<256xf32>
    %12 = vector.multi_reduction <add>, %11, %cst_7 [0] : vector<32x256xf32> to vector<256xf32>
    %13 = vector.shape_cast %12 : vector<256xf32> to vector<1x256xf32>
    %14 = vector.broadcast %13 : vector<1x256xf32> to vector<256x256xf32>
    %15 = arith.addf %8, %14 : vector<256x256xf32>
    %cst_8 = arith.constant dense<0xFF800000> : vector<256xf32>
    %16 = vector.multi_reduction <maximumf>, %15, %cst_8 [1] : vector<256x256xf32> to vector<256xf32>
    %17 = vector.shape_cast %16 : vector<256xf32> to vector<256x1xf32>
    %18 = vector.broadcast %17 : vector<256x1xf32> to vector<256x256xf32>
    %19 = arith.subf %15, %18 : vector<256x256xf32>
    %20 = math.exp %19 : vector<256x256xf32>
    %cst_9 = arith.constant dense<0.000000e+00> : vector<256xf32>
    %21 = vector.multi_reduction <add>, %20, %cst_9 [1] : vector<256x256xf32> to vector<256xf32>
    %22 = vector.shape_cast %21 : vector<256xf32> to vector<256x1xf32>
    %23 = tpu.reciprocal %22 {approx = true} : vector<256x1xf32> -> vector<256x1xf32>
    %24 = vector.broadcast %23 : vector<256x1xf32> to vector<256x256xf32>
    %25 = arith.mulf %20, %24 : vector<256x256xf32>
    %c0_10 = arith.constant 0 : index
    %c0_11 = arith.constant 0 : index
    %26 = vector.load %arg5[%c0_10, %c0_11] : memref<32x32xbf16, #tpu.memory_space<vmem>>, vector<32x32xbf16>
    %cst_12 = arith.constant dense<0.000000e+00> : vector<32x256xf32>
    %27 = tpu.matmul %26, %2, %cst_12 {dimension_numbers = #tpu.dot_dimension_numbers<[1], [0], [0], [1], [0, 0, 1, 1], [], []>} : vector<32x32xbf16>, vector<32x256xbf16>, vector<32x256xf32> -> vector<32x256xf32>
    %c0_13 = arith.constant 0 : index
    %c0_14 = arith.constant 0 : index
    %28 = vector.load %arg6[%c0_13, %c0_14] : memref<32x1xf32, #tpu.memory_space<vmem>>, vector<32x1xf32>
    %29 = vector.broadcast %28 : vector<32x1xf32> to vector<32x256xf32>
    %30 = arith.addf %27, %29 : vector<32x256xf32>
    %31 = arith.truncf %30 : vector<32x256xf32> to vector<32x256xbf16>
    %32 = arith.truncf %25 : vector<256x256xf32> to vector<256x256xbf16>
    %cst_15 = arith.constant dense<0.000000e+00> : vector<32x256xf32>
    %33 = tpu.matmul %31, %32, %cst_15 {dimension_numbers = #tpu.dot_dimension_numbers<[1], [1], [0], [0], [0, 0, 1, 0], [], []>} : vector<32x256xbf16>, vector<256x256xbf16>, vector<32x256xf32> -> vector<32x256xf32>
    %c0_16 = arith.constant 0 : index
    %c0_17 = arith.constant 0 : index
    %34 = memref.load %arg1[%c0_16, %c0_17] : memref<1x1xf32, #tpu.memory_space<smem>>
    %35 = vector.broadcast %34 : f32 to vector<32x256xf32>
    %36 = arith.mulf %35, %33 : vector<32x256xf32>
    %37 = arith.addf %36, %1 : vector<32x256xf32>
    %c0_18 = arith.constant 0 : index
    %c0_19 = arith.constant 0 : index
    %c0_20 = arith.constant 0 : index
    %38 = vector.load %arg7[%c0_18, %c0_19, %c0_20] : memref<1x32x256xf32, #tpu.memory_space<vmem>>, vector<1x32x256xf32>
    %39 = vector.shape_cast %38 : vector<1x32x256xf32> to vector<32x256xf32>
    %40 = vector.shape_cast %37 : vector<32x256xf32> to vector<1x32x256xf32>
    tpu.vector_store %arg7[%c0_18, %c0_19, %c0_20], %40 {strides = array<i32>} : memref<1x32x256xf32, #tpu.memory_space<vmem>>, vector<1x32x256xf32>,
    return
  }
  func.func @transform_0(%arg0: i32) -> (i32, i32) {
    %c0_i32 = arith.constant 0 : i32
    %c0_i32_0 = arith.constant 0 : i32
    %c0_i32_1 = arith.constant 0 : i32
    return %c0_i32, %c0_i32_0 : i32, i32
  }
  func.func @transform_1(%arg0: i32) -> (i32, i32, i32) {
    %c0_i32 = arith.constant 0 : i32
    %c0_i32_0 = arith.constant 0 : i32
    %c0_i32_1 = arith.constant 0 : i32
    return %arg0, %c0_i32, %c0_i32_0 : i32, i32, i32
  }
  func.func @transform_2(%arg0: i32) -> (i32, i32) {
    %c0_i32 = arith.constant 0 : i32
    %c0_i32_0 = arith.constant 0 : i32
    %c0_i32_1 = arith.constant 0 : i32
    return %c0_i32, %c0_i32_0 : i32, i32
  }
  func.func @transform_3(%arg0: i32) -> (i32, i32) {
    %c0_i32 = arith.constant 0 : i32
    %c0_i32_0 = arith.constant 0 : i32
    %c0_i32_1 = arith.constant 0 : i32
    return %c0_i32, %c0_i32_0 : i32, i32
  }
  func.func @transform_4(%arg0: i32) -> (i32, i32) {
    %c0_i32 = arith.constant 0 : i32
    %c0_i32_0 = arith.constant 0 : i32
    %c0_i32_1 = arith.constant 0 : i32
    return %c0_i32, %c0_i32_0 : i32, i32
  }
  func.func @transform_5(%arg0: i32) -> (i32, i32) {
    %c0_i32 = arith.constant 0 : i32
    %c0_i32_0 = arith.constant 0 : i32
    %c0_i32_1 = arith.constant 0 : i32
    return %c0_i32, %c0_i32_0 : i32, i32
  }
  func.func @transform_6(%arg0: i32) -> (i32, i32, i32) {
    %c0_i32 = arith.constant 0 : i32
    %c0_i32_0 = arith.constant 0 : i32
    %c0_i32_1 = arith.constant 0 : i32
    return %arg0, %c0_i32, %c0_i32_0 : i32, i32, i32
  }
}

</mosaic_0001>

<llo_original>
// kernel: tpu_custom_call.1
$region0: #{tpu_custom_call.1}
  #allocation0 [shape = 'u32[]', space=smem, size = 0x4, offset = 0x4, fixed_abs, tag = 'smem constant byte address 0x4 - core index']
  #allocation1 [shape = 'u32[144,128]{1,0:T(1,128)}', space=vmem, size = 0x12000, scoped, tag = 'internal scratch']
  #allocation2 [shape = 'f32[1,1]{1,0:T(1,128)S(6)}', space=smem, size = 0x200, scoped, tag = 'scoped memory for tpu_custom_call.1']
  %s0 = inlined_call_operand.<no memory space> [shape: f32[1,1], index: 0, kind: input, shape index: {}]
  %s1 = inlined_call_operand.hbm [shape: f32[2,32,256], index: 1, kind: input, shape index: {}]
  %s2 = inlined_call_operand.vmem [shape: bf16[32,32], index: 2, kind: input, shape index: {}]
  %s3 = inlined_call_operand.vmem [shape: f32[32,1], index: 3, kind: input, shape index: {}]
  %s4 = inlined_call_operand.vmem [shape: bf16[32,32], index: 4, kind: input, shape index: {}]
  %s5 = inlined_call_operand.vmem [shape: f32[32,1], index: 5, kind: input, shape index: {}]
  %s6 = inlined_call_operand.hbm [shape: f32[2,32,256], index: 6, kind: output, shape index: {}]
  %s7 = sld [smem:[#allocation0]]
  $region61: #{tpu_custom_call.1} parent=0
    _
  %s9 = ssub.s32 1, %s7
  %s10 = scalar_select 0, %s9, %s7
  %11 = sst [smem:[#allocation2]] %s0
  $region1: #{tpu_custom_call.1} parent=0
    #allocation3 [shape = 'u8[65536]{0}', space=vmem, size = 0x10000, scoped, tag = 'input window, operand 1']
    #allocation4 [shape = 's32[2]{0}', space=sflag, size = 0x8, scoped, tag = 'scoped memory for tpu_custom_call.1']
    #allocation5 [shape = 's32[2]{0}', space=sflag, size = 0x8, scoped, tag = 'scoped memory for tpu_custom_call.1']
    #allocation6 [shape = 'u8[65536]{0}', space=vmem, size = 0x10000, scoped, tag = 'output window, operand 0']
    %12 = vsyncpa [#allocation4], 0
    %s13 = scalar_lea.sflag [#allocation4], 1
    %14 = vsyncpa %s13, 0
    %15 = vsyncpa [#allocation5], 0
    %s16 = scalar_lea.sflag [#allocation5], 1
    %17 = vsyncpa %s16, 0
    loop: start=0, step=1, limit=4
    $region2: #{tpu_custom_call.1} parent=1 // loop_pre_header
      _
    $region3: #{tpu_custom_call.1} parent=1 // loop_header
      %s19 = sphi 0, %s23
      %p20 = scmp.ge.s32.totalorder %s19, 4
      %s27 = sphi 0, %s27
      %s29 = sphi 0, %s27
      %s30 = sphi 0, %s29
      %s44 = sphi 0, %s30
      %s50 = sphi 0, %s52
      %s53 = sphi 0, %s50
      %s54 = sphi 0, %s53
      %s70 = sphi 0, %s54
      %s74 = sphi 0, %s74
      %s76 = sphi 0, %s74
      %s77 = sphi 0, %s76
      %s91 = sphi 0, %s77
      %s95 = sphi 0, %s95
      %s97 = sphi 0, %s95
      %s98 = sphi 0, %s97
      %s112 = sphi 0, %s98
      %s116 = sphi 0, %s116
      %s118 = sphi 0, %s116
      %s119 = sphi 0, %s118
      %s133 = sphi 0, %s119
      %s137 = sphi 0, %s137
      %s139 = sphi 0, %s137
      %s140 = sphi 0, %s139
      %s154 = sphi 0, %s140
      %s160 = sphi 0, %s162
      %s163 = sphi 0, %s160
      %s164 = sphi 0, %s163
      %s180 = sphi 0, %s164
    $region4: #{tpu_custom_call.1} parent=1 // loop_header_branch
      %22 = sbr.rel (%p20) target = $region8
    $region5: #{tpu_custom_call.1} parent=1 // loop_body
      %s24 = ssub.s32 %s19, 1
      %s25 = ssub.s32 %s19, 2
      %s26 = sadd.s32 %s19, 1
      %s28 = sadd.s32 %s27, 1
      %p31 = scmp.eq.s32.totalorder %s19, 1
      %p32 = scmp.ne.s32.totalorder %s27, %s29
      %p33 = scmp.eq.s32.totalorder %s19, 0
      %p34 = por %p32, %p33
      %p35 = scmp.ne.s32.totalorder %s27, %s29
      %p36 = scmp.eq.s32.totalorder %s24, 1
      %p37 = por %p35, %p36
      %p38 = scmp.ne.s32.totalorder %s29, %s30
      %p39 = scmp.eq.s32.totalorder %s24, 0
      %p40 = por %p38, %p39
      %p41 = scmp.ne.s32.totalorder %s29, %s30
      %p42 = scmp.eq.s32.totalorder %s25, 1
      %p43 = por %p41, %p42
      %p45 = scmp.ne.s32.totalorder %s30, %s44
      %p46 = scmp.eq.s32.totalorder %s25, 0
      %p47 = por %p45, %p46
      %s48 = ssub.s32 %s19, %s26
      %p49 = scmp.eq.s32.totalorder %s48, 0
      %s51 = sadd.s32 %s50, 1
      %s52 = scalar_select %p49, %s50, %s51
      %p55 = pneg %p49
      %p56 = scmp.eq.s32.totalorder %s19, 1
      %p57 = por %p55, %p56
      %p58 = scmp.ne.s32.totalorder %s50, %s53
      %p59 = scmp.eq.s32.totalorder %s19, 0
      %p60 = por %p58, %p59
      %p61 = scmp.ne.s32.totalorder %s50, %s53
      %p62 = scmp.eq.s32.totalorder %s24, 1
      %p63 = por %p61, %p62
      %p64 = scmp.ne.s32.totalorder %s53, %s54
      %p65 = scmp.eq.s32.totalorder %s24, 0
      %p66 = por %p64, %p65
      %p67 = scmp.ne.s32.totalorder %s53, %s54
      %p68 = scmp.eq.s32.totalorder %s25, 1
      %p69 = por %p67, %p68
      %p71 = scmp.ne.s32.totalorder %s54, %s70
      %p72 = scmp.eq.s32.totalorder %s25, 0
      %p73 = por %p71, %p72
      %s75 = sadd.s32 %s74, 1
      %p78 = scmp.eq.s32.totalorder %s19, 1
      %p79 = scmp.ne.s32.totalorder %s74, %s76
      %p80 = scmp.eq.s32.totalorder %s19, 0
      %p81 = por %p79, %p80
      %p82 = scmp.ne.s32.totalorder %s74, %s76
      %p83 = scmp.eq.s32.totalorder %s24, 1
      %p84 = por %p82, %p83
      %p85 = scmp.ne.s32.totalorder %s76, %s77
      %p86 = scmp.eq.s32.totalorder %s24, 0
      %p87 = por %p85, %p86
      %p88 = scmp.ne.s32.totalorder %s76, %s77
      %p89 = scmp.eq.s32.totalorder %s25, 1
      %p90 = por %p88, %p89
      %p92 = scmp.ne.s32.totalorder %s77, %s91
      %p93 = scmp.eq.s32.totalorder %s25, 0
      %p94 = por %p92, %p93
      %s96 = sadd.s32 %s95, 1
      %p99 = scmp.eq.s32.totalorder %s19, 1
      %p100 = scmp.ne.s32.totalorder %s95, %s97
      %p101 = scmp.eq.s32.totalorder %s19, 0
      %p102 = por %p100, %p101
      %p103 = scmp.ne.s32.totalorder %s95, %s97
      %p104 = scmp.eq.s32.totalorder %s24, 1
      %p105 = por %p103, %p104
      %p106 = scmp.ne.s32.totalorder %s97, %s98
      %p107 = scmp.eq.s32.totalorder %s24, 0
      %p108 = por %p106, %p107
      %p109 = scmp.ne.s32.totalorder %s97, %s98
      %p110 = scmp.eq.s32.totalorder %s25, 1
      %p111 = por %p109, %p110
      %p113 = scmp.ne.s32.totalorder %s98, %s112
      %p114 = scmp.eq.s32.totalorder %s25, 0
      %p115 = por %p113, %p114
      %s117 = sadd.s32 %s116, 1
      %p120 = scmp.eq.s32.totalorder %s19, 1
      %p121 = scmp.ne.s32.totalorder %s116, %s118
      %p122 = scmp.eq.s32.totalorder %s19, 0
      %p123 = por %p121, %p122
      %p124 = scmp.ne.s32.totalorder %s116, %s118
      %p125 = scmp.eq.s32.totalorder %s24, 1
      %p126 = por %p124, %p125
      %p127 = scmp.ne.s32.totalorder %s118, %s119
      %p128 = scmp.eq.s32.totalorder %s24, 0
      %p129 = por %p127, %p128
      %p130 = scmp.ne.s32.totalorder %s118, %s119
      %p131 = scmp.eq.s32.totalorder %s25, 1
      %p132 = por %p130, %p131
      %p134 = scmp.ne.s32.totalorder %s119, %s133
      %p135 = scmp.eq.s32.totalorder %s25, 0
      %p136 = por %p134, %p135
      %s138 = sadd.s32 %s137, 1
      %p141 = scmp.eq.s32.totalorder %s19, 1
      %p142 = scmp.ne.s32.totalorder %s137, %s139
      %p143 = scmp.eq.s32.totalorder %s19, 0
      %p144 = por %p142, %p143
      %p145 = scmp.ne.s32.totalorder %s137, %s139
      %p146 = scmp.eq.s32.totalorder %s24, 1
      %p147 = por %p145, %p146
      %p148 = scmp.ne.s32.totalorder %s139, %s140
      %p149 = scmp.eq.s32.totalorder %s24, 0
      %p150 = por %p148, %p149
      %p151 = scmp.ne.s32.totalorder %s139, %s140
      %p152 = scmp.eq.s32.totalorder %s25, 1
      %p153 = por %p151, %p152
      %p155 = scmp.ne.s32.totalorder %s140, %s154
      %p156 = scmp.eq.s32.totalorder %s25, 0
      %p157 = por %p155, %p156
      %s158 = ssub.s32 %s19, %s26
      %p159 = scmp.eq.s32.totalorder %s158, 0
      %s161 = sadd.s32 %s160, 1
      %s162 = scalar_select %p159, %s160, %s161
      %p165 = pneg %p159
      %p166 = scmp.eq.s32.totalorder %s19, 1
      %p167 = por %p165, %p166
      %p168 = scmp.ne.s32.totalorder %s160, %s163
      %p169 = scmp.eq.s32.totalorder %s19, 0
      %p170 = por %p168, %p169
      %p171 = scmp.ne.s32.totalorder %s160, %s163
      %p172 = scmp.eq.s32.totalorder %s24, 1
      %p173 = por %p171, %p172
      %p174 = scmp.ne.s32.totalorder %s163, %s164
      %p175 = scmp.eq.s32.totalorder %s24, 0
      %p176 = por %p174, %p175
      %p177 = scmp.ne.s32.totalorder %s163, %s164
      %p178 = scmp.eq.s32.totalorder %s25, 1
      %p179 = por %p177, %p178
      %p181 = scmp.ne.s32.totalorder %s164, %s180
      %p182 = scmp.eq.s32.totalorder %s25, 0
      %p183 = por %p181, %p182
      %p184 = scmp.le.s32.totalorder 1, %s19
      %p185 = scmp.lt.s32.totalorder %s19, 3
      %p186 = pnand %p184, %p185
      %p187 = pneg %p186
      // Predicated region
      $region9: #{tpu_custom_call.1} parent=5 // pred_check
        _
      $region10: #{tpu_custom_call.1} parent=5 // pred_check_branch
        %189 = sbr.rel (%p186) target = $region12
      $region11: #{tpu_custom_call.1} parent=5 // pred_region
        %s190 = ssub.s32 %s19, 1
        // Predicated region
        $region13: #{tpu_custom_call.1} parent=11 // pred_check
          %p191 = pneg %p40
        $region14: #{tpu_custom_call.1} parent=11 // pred_check_branch
          %193 = sbr.rel (%p191) target = $region16
        $region15: #{tpu_custom_call.1} parent=11 // pred_region
          _
        $region16: #{tpu_custom_call.1} parent=11 // pred_fallthru
          _
        // Predicated region
        $region17: #{tpu_custom_call.1} parent=11 // pred_check
          %p194 = pneg %p87
        $region18: #{tpu_custom_call.1} parent=11 // pred_check_branch
          %196 = sbr.rel (%p194) target = $region20
        $region19: #{tpu_custom_call.1} parent=11 // pred_region
          _
        $region20: #{tpu_custom_call.1} parent=11 // pred_fallthru
          _
        // Predicated region
        $region21: #{tpu_custom_call.1} parent=11 // pred_check
          %p197 = pneg %p108
        $region22: #{tpu_custom_call.1} parent=11 // pred_check_branch
          %199 = sbr.rel (%p197) target = $region24
        $region23: #{tpu_custom_call.1} parent=11 // pred_region
          _
        $region24: #{tpu_custom_call.1} parent=11 // pred_fallthru
          _
        // Predicated region
        $region25: #{tpu_custom_call.1} parent=11 // pred_check
          %p200 = pneg %p129
        $region26: #{tpu_custom_call.1} parent=11 // pred_check_branch
          %202 = sbr.rel (%p200) target = $region28
        $region27: #{tpu_custom_call.1} parent=11 // pred_region
          _
        $region28: #{tpu_custom_call.1} parent=11 // pred_fallthru
          _
        // Predicated region
        $region29: #{tpu_custom_call.1} parent=11 // pred_check
          %p203 = pneg %p150
        $region30: #{tpu_custom_call.1} parent=11 // pred_check_branch
          %205 = sbr.rel (%p203) target = $region32
        $region31: #{tpu_custom_call.1} parent=11 // pred_region
          _
        $region32: #{tpu_custom_call.1} parent=11 // pred_fallthru
          _
      $region12: #{tpu_custom_call.1} parent=5 // pred_fallthru
        _
      %p206 = scmp.lt.s32.totalorder %s19, 2
      // Predicated region
      $region33: #{tpu_custom_call.1} parent=5 // pred_check
        %p207 = pneg %p206
      $region34: #{tpu_custom_call.1} parent=5 // pred_check_branch
        %209 = sbr.rel (%p207) target = $region36
      $region35: #{tpu_custom_call.1} parent=5 // pred_region
        // Predicated region
        $region37: #{tpu_custom_call.1} parent=35 // pred_check
          %p210 = pneg %p60
        $region38: #{tpu_custom_call.1} parent=35 // pred_check_branch
          %212 = sbr.rel (%p210) target = $region40
        $region39: #{tpu_custom_call.1} parent=35 // pred_region
          %s213 = sand.u32 %s50, 1
          %s214 = scalar_lea.sflag [#allocation4], %s213
          %s215 = sand.u32 %s50, 1
          %s216 = smul.addr %s215, 64
          %s217 = scalar_lea.vmem [#allocation3], %s216
          %s219 = ssub.s32 1024, 1024
          %220 = vsyncadd %s214, %s219
          %s221 = smul.addr %s19, 8
          %s222 = smul.addr %s221, 128
          %s223 = scalar_lea.hbm %s1, %s222
          %s224 = sshll.u32 %s217, 4
          %s225 = int_to_ptr.vmem [resolvable:$true] %s224
          %230 = dma.hbm_to_vmem [thread:$0]  %s223, 1024, %s225, %s214, 256, 256, 16
        $region40: #{tpu_custom_call.1} parent=35 // pred_fallthru
          _
      $region36: #{tpu_custom_call.1} parent=5 // pred_fallthru
        _
      %p231 = scmp.le.s32.totalorder 1, %s19
      %p232 = scmp.lt.s32.totalorder %s19, 3
      %p233 = pnand %p231, %p232
      %p234 = pneg %p233
      // Predicated region
      $region41: #{tpu_custom_call.1} parent=5 // pred_check
        _
      $region42: #{tpu_custom_call.1} parent=5 // pred_check_branch
        %236 = sbr.rel (%p233) target = $region44
      $region43: #{tpu_custom_call.1} parent=5 // pred_region
        %s237 = ssub.s32 %s19, 1
        %s238 = sand.u32 %s53, 1
        %s239 = scalar_lea.sflag [#allocation4], %s238
        %s240 = sand.u32 %s53, 1
        %s241 = smul.addr %s240, 64
        %s242 = scalar_lea.vmem [#allocation3], %s241
        // Predicated region
        $region45: #{tpu_custom_call.1} parent=43 // pred_check
          %p243 = pneg %p66
        $region46: #{tpu_custom_call.1} parent=43 // pred_check_branch
          %245 = sbr.rel (%p243) target = $region48
        $region47: #{tpu_custom_call.1} parent=43 // pred_region
          %246 = dma.done %s239, 1024
        $region48: #{tpu_custom_call.1} parent=43 // pred_fallthru
          _
        %p247 = pneg %p40
        %p248 = pneg %p37
        %s249 = sand.u32 %s53, 1
        %s250 = scalar_lea.sflag [#allocation4], %s249
        %s251 = sand.u32 %s53, 1
        %s252 = smul.addr %s251, 64
        %s253 = scalar_lea.vmem [#allocation3], %s252
        %p254 = pneg %p66
        %p255 = pneg %p63
        %p256 = pneg %p87
        %p257 = pneg %p84
        %p258 = pneg %p108
        %p259 = pneg %p105
        %p260 = pneg %p129
        %p261 = pneg %p126
        %p262 = pneg %p150
        %p263 = pneg %p147
        %p264 = pneg %p176
        %p265 = pneg %p173
        %s266 = sand.u32 %s163, 1
        %s267 = scalar_lea.sflag [#allocation5], %s266
        %s268 = sand.u32 %s163, 1
        %s269 = smul.addr %s268, 64
        %s270 = scalar_lea.vmem [#allocation6], %s269
        %v272 = vld [vmem:[%s242] sm:$0xff]
        %v273 = vld [vmem:[%s242 + $0x8] sm:$0xff]
        %v274 = vld [vmem:[%s242 + $0x10] sm:$0xff]
        %v275 = vld [vmem:[%s242 + $0x18] sm:$0xff]
        %v276 = vld [vmem:[%s242 + $0x20] sm:$0xff]
        %v277 = vld [vmem:[%s242 + $0x28] sm:$0xff]
        %v278 = vld [vmem:[%s242 + $0x30] sm:$0xff]
        %v279 = vld [vmem:[%s242 + $0x38] sm:$0xff]
        %v280 = vpack.c.bf16 %v274, %v272
        %v281 = vpack.c.bf16 %v275, %v273
        %v282 = vpack.c.bf16 %v278, %v276
        %v283 = vpack.c.bf16 %v279, %v277
        %284 = vxpose.xlu0.b32.start [1/16] %v272, 128
        %285 = vxpose.xlu0.b32.cont [2/16] %v274, 128
        %286 = vxpose.xlu0.b32.cont [3/16] %v276, 128
        %287 = vxpose.xlu0.b32.cont [4/16] %v278, 128
        %288 = vxpose.xlu0.b32.cont [5/16] 0.0, 128
        %289 = vxpose.xlu0.b32.cont [6/16] 0.0, 128
        %290 = vxpose.xlu0.b32.cont [7/16] 0.0, 128
        %291 = vxpose.xlu0.b32.cont [8/16] 0.0, 128
        %292 = vxpose.xlu0.b32.cont [9/16] 0.0, 128
        %293 = vxpose.xlu0.b32.cont [10/16] 0.0, 128
        %294 = vxpose.xlu0.b32.cont [11/16] 0.0, 128
        %295 = vxpose.xlu0.b32.cont [12/16] 0.0, 128
        %296 = vxpose.xlu0.b32.cont [13/16] 0.0, 128
        %297 = vxpose.xlu0.b32.cont [14/16] 0.0, 128
        %298 = vxpose.xlu0.b32.cont [15/16] 0.0, 128
        %299 = vxpose.xlu0.b32.end [16/16] 0.0, 128
        %v300 = vpop.trf.xlu0
        %v301 = vpop.trf.xlu0
        %v302 = vpop.trf.xlu0
        %v303 = vpop.trf.xlu0
        %v304 = vpop.trf.xlu0
        %v305 = vpop.trf.xlu0
        %v306 = vpop.trf.xlu0
        %v307 = vpop.trf.xlu0
        %v308 = vpop.trf.xlu0
        %v309 = vpop.trf.xlu0
        %v310 = vpop.trf.xlu0
        %v311 = vpop.trf.xlu0
        %v312 = vpop.trf.xlu0
        %v313 = vpop.trf.xlu0
        %v314 = vpop.trf.xlu0
        %v315 = vpop.trf.xlu0
        %316 = vxpose.xlu0.b32.start [1/16] %v273, 128
        %317 = vxpose.xlu0.b32.cont [2/16] %v275, 128
        %318 = vxpose.xlu0.b32.cont [3/16] %v277, 128
        %319 = vxpose.xlu0.b32.cont [4/16] %v279, 128
        %320 = vxpose.xlu0.b32.cont [5/16] 0.0, 128
        %321 = vxpose.xlu0.b32.cont [6/16] 0.0, 128
        %322 = vxpose.xlu0.b32.cont [7/16] 0.0, 128
        %323 = vxpose.xlu0.b32.cont [8/16] 0.0, 128
        %324 = vxpose.xlu0.b32.cont [9/16] 0.0, 128
        %325 = vxpose.xlu0.b32.cont [10/16] 0.0, 128
        %326 = vxpose.xlu0.b32.cont [11/16] 0.0, 128
        %327 = vxpose.xlu0.b32.cont [12/16] 0.0, 128
        %328 = vxpose.xlu0.b32.cont [13/16] 0.0, 128
        %329 = vxpose.xlu0.b32.cont [14/16] 0.0, 128
        %330 = vxpose.xlu0.b32.cont [15/16] 0.0, 128
        %331 = vxpose.xlu0.b32.end [16/16] 0.0, 128
        %v332 = vpop.trf.xlu0
        %v333 = vpop.trf.xlu0
        %v334 = vpop.trf.xlu0
        %v335 = vpop.trf.xlu0
        %v336 = vpop.trf.xlu0
        %v337 = vpop.trf.xlu0
        %v338 = vpop.trf.xlu0
        %v339 = vpop.trf.xlu0
        %v340 = vpop.trf.xlu0
        %v341 = vpop.trf.xlu0
        %v342 = vpop.trf.xlu0
        %v343 = vpop.trf.xlu0
        %v344 = vpop.trf.xlu0
        %v345 = vpop.trf.xlu0
        %v346 = vpop.trf.xlu0
        %v347 = vpop.trf.xlu0
        %v348 = vpack.c.bf16 %v301, %v300
        %v349 = vpack.c.bf16 %v303, %v302
        %v350 = vpack.c.bf16 %v305, %v304
        %v351 = vpack.c.bf16 %v307, %v306
        %v352 = vpack.c.bf16 %v309, %v308
        %v353 = vpack.c.bf16 %v311, %v310
        %v354 = vpack.c.bf16 %v313, %v312
        %v355 = vpack.c.bf16 %v315, %v314
        %v356 = vpack.c.bf16 %v333, %v332
        %v357 = vpack.c.bf16 %v335, %v334
        %v358 = vpack.c.bf16 %v337, %v336
        %v359 = vpack.c.bf16 %v339, %v338
        %v360 = vpack.c.bf16 %v341, %v340
        %v361 = vpack.c.bf16 %v343, %v342
        %v362 = vpack.c.bf16 %v345, %v344
        %v363 = vpack.c.bf16 %v347, %v346
        %v364 = vld [vmem:[%s2] sm:$0xf]
        %v365 = vld [vmem:[%s2 + $0x4] sm:$0xf]
        %v366 = vld [vmem:[%s2 + $0x8] sm:$0xf]
        %v367 = vld [vmem:[%s2 + $0xc] sm:$0xf]
        %v372 = vunpack.c.l.b16 %v364
        %v373 = vunpack.c.l.b16 %v365
        %v374 = vunpack.c.l.b16 %v366
        %v375 = vunpack.c.l.b16 %v367
        %v376 = vpack.c.b16 %v373, %v372
        %v377 = vpack.c.b16 %v375, %v374
        %vm378 = vcmask 261120
        %v380 = vsel %vm378, %v376, 0
        %v383 = vsel %vm378, %v377, 0
        %385 = vmatprep.subr.bf16.mxu0 %v281
        %386 = vmatpush1.bf16.msra.mxu0 %v280
        %387 = vmatprep.subr.bf16.mxu0 %v283
        %388 = vmatpush1.bf16.msra.mxu0 %v282
        %389 = vmatprep.subr.bf16.mxu0 0
        %390 = vmatpush1.bf16.msra.mxu0 0
        %391 = vmatprep.subr.bf16.mxu0 0
        %392 = vmatpush1.bf16.msra.mxu0 0
        %393 = vmatprep.subr.bf16.mxu0 0
        %394 = vmatpush1.bf16.msra.mxu0 0
        %395 = vmatprep.subr.bf16.mxu0 0
        %396 = vmatpush1.bf16.msra.mxu0 0
        %397 = vmatprep.subr.bf16.mxu0 0
        %398 = vmatpush1.bf16.msra.mxu0 0
        %399 = vmatprep.subr.bf16.mxu0 0
        %400 = vmatpush1.bf16.msra.mxu0 0
        %401 = vmatprep.subr.bf16.mxu0 0
        %402 = vmatpush1.bf16.msra.mxu0 0
        %403 = vmatprep.subr.bf16.mxu0 0
        %404 = vmatpush1.bf16.msra.mxu0 0
        %405 = vmatprep.subr.bf16.mxu0 0
        %406 = vmatpush1.bf16.msra.mxu0 0
        %407 = vmatprep.subr.bf16.mxu0 0
        %408 = vmatpush1.bf16.msra.mxu0 0
        %409 = vmatprep.subr.bf16.mxu0 0
        %410 = vmatpush1.bf16.msra.mxu0 0
        %411 = vmatprep.subr.bf16.mxu0 0
        %412 = vmatpush1.bf16.msra.mxu0 0
        %413 = vmatprep.subr.bf16.mxu0 0
        %414 = vmatpush1.bf16.msra.mxu0 0
        %415 = vmatprep.subr.bf16.mxu0 0
        %416 = vmatpush1.bf16.msra.mxu0 0
        %417 = vmatprep.mubr.bf16.mxu0 0
        %418 = vmatmul.mubr.bf16.gmra.mrb[0].mxu0 %v380
        %v419 = vpop.f32.mrb[0].mxu0
        %v420 = vadd.f32 0.0, %v419
        %v421 = vpop.f32.mrb[0].mxu0
        %v422 = vadd.f32 0.0, %v421
        %v423 = vpop.f32.mrb[0].mxu0
        %v424 = vadd.f32 0.0, %v423
        %v425 = vpop.f32.mrb[0].mxu0
        %v426 = vadd.f32 0.0, %v425
        %427 = vmatprep.mubr.bf16.mxu0 0
        %428 = vmatmul.mubr.bf16.gmra.mrb[0].mxu0 %v383
        %v429 = vpop.f32.mrb[0].mxu0
        %v430 = vadd.f32 0.0, %v429
        %v431 = vpop.f32.mrb[0].mxu0
        %v432 = vadd.f32 0.0, %v431
        %v433 = vpop.f32.mrb[0].mxu0
        %v434 = vadd.f32 0.0, %v433
        %v435 = vpop.f32.mrb[0].mxu0
        %v436 = vadd.f32 0.0, %v435
        %437 = vdwg.mxu0
        %v438 = vpack.c.bf16 %v424, %v420
        %v439 = vpack.c.bf16 %v426, %v422
        %v440 = vpack.c.bf16 %v434, %v430
        %v441 = vpack.c.bf16 %v436, %v432
        %v442 = vld [vmem:[%s3] sm:$0xff]
        %v443 = vld [vmem:[%s3 + $0x8] sm:$0xff]
        %v444 = vld [vmem:[%s3 + $0x10] sm:$0xff]
        %v445 = vld [vmem:[%s3 + $0x18] sm:$0xff]
        %447 = vset.pattern.permute.xlu0 0
        %448 = vperm.xlu0 %447, %v442
        %v449 = vpop.permute.xlu0 %448
        %452 = vset.pattern.permute.xlu0 0
        %453 = vperm.xlu0 %452, %v443
        %v454 = vpop.permute.xlu0 %453
        %457 = vset.pattern.permute.xlu0 0
        %458 = vperm.xlu0 %457, %v444
        %v459 = vpop.permute.xlu0 %458
        %462 = vset.pattern.permute.xlu0 0
        %463 = vperm.xlu0 %462, %v445
        %v464 = vpop.permute.xlu0 %463
        %v466 = vmul.f32 %v272, %v449
        %v467 = vmul.f32 %v273, %v449
        %v468 = vmul.f32 %v274, %v454
        %v469 = vmul.f32 %v275, %v454
        %v470 = vmul.f32 %v276, %v459
        %v471 = vmul.f32 %v277, %v459
        %v472 = vmul.f32 %v278, %v464
        %v473 = vmul.f32 %v279, %v464
        %v474 = vadd.f32 %v466, %v468
        %v475 = vadd.f32 %v474, %v470
        %v476 = vadd.f32 %v475, %v472
        %v477 = vrot.slane %v476, 4
        %v478 = vadd.f32 %v476, %v477
        %v479 = vrot.slane %v478, 2
        %v480 = vadd.f32 %v478, %v479
        %v481 = vrot.slane %v480, 1
        %v482 = vadd.f32 %v480, %v481
        %v483 = vadd.f32 %v467, %v469
        %v484 = vadd.f32 %v483, %v471
        %v485 = vadd.f32 %v484, %v473
        %v486 = vrot.slane %v485, 4
        %v487 = vadd.f32 %v485, %v486
        %v488 = vrot.slane %v487, 2
        %v489 = vadd.f32 %v487, %v488
        %v490 = vrot.slane %v489, 1
        %v491 = vadd.f32 %v489, %v490
        %v493 = vsel %vm378, %v348, 0
        %v496 = vsel %vm378, %v349, 0
        %v499 = vsel %vm378, %v350, 0
        %v502 = vsel %vm378, %v351, 0
        %v505 = vsel %vm378, %v352, 0
        %v508 = vsel %vm378, %v353, 0
        %v511 = vsel %vm378, %v354, 0
        %v514 = vsel %vm378, %v355, 0
        %v517 = vsel %vm378, %v356, 0
        %v520 = vsel %vm378, %v357, 0
        %v523 = vsel %vm378, %v358, 0
        %v526 = vsel %vm378, %v359, 0
        %v529 = vsel %vm378, %v360, 0
        %v532 = vsel %vm378, %v361, 0
        %v535 = vsel %vm378, %v362, 0
        %v538 = vsel %vm378, %v363, 0
        %540 = vmatprep.subr.bf16.mxu0 %v439
        %541 = vmatpush1.bf16.msra.mxu0 %v438
        %542 = vmatprep.subr.bf16.mxu0 %v441
        %543 = vmatpush1.bf16.msra.mxu0 %v440
        %544 = vmatprep.subr.bf16.mxu0 0
        %545 = vmatpush1.bf16.msra.mxu0 0
        %546 = vmatprep.subr.bf16.mxu0 0
        %547 = vmatpush1.bf16.msra.mxu0 0
        %548 = vmatprep.subr.bf16.mxu0 0
        %549 = vmatpush1.bf16.msra.mxu0 0
        %550 = vmatprep.subr.bf16.mxu0 0
        %551 = vmatpush1.bf16.msra.mxu0 0
        %552 = vmatprep.subr.bf16.mxu0 0
        %553 = vmatpush1.bf16.msra.mxu0 0
        %554 = vmatprep.subr.bf16.mxu0 0
        %555 = vmatpush1.bf16.msra.mxu0 0
        %556 = vmatprep.subr.bf16.mxu0 0
        %557 = vmatpush1.bf16.msra.mxu0 0
        %558 = vmatprep.subr.bf16.mxu0 0
        %559 = vmatpush1.bf16.msra.mxu0 0
        %560 = vmatprep.subr.bf16.mxu0 0
        %561 = vmatpush1.bf16.msra.mxu0 0
        %562 = vmatprep.subr.bf16.mxu0 0
        %563 = vmatpush1.bf16.msra.mxu0 0
        %564 = vmatprep.subr.bf16.mxu0 0
        %565 = vmatpush1.bf16.msra.mxu0 0
        %566 = vmatprep.subr.bf16.mxu0 0
        %567 = vmatpush1.bf16.msra.mxu0 0
        %568 = vmatprep.subr.bf16.mxu0 0
        %569 = vmatpush1.bf16.msra.mxu0 0
        %570 = vmatprep.subr.bf16.mxu0 0
        %571 = vmatpush1.bf16.msra.mxu0 0
        %572 = vmatprep.mubr.bf16.mxu0 0
        %573 = vmatmul.mubr.bf16.gmra.mrb[0].mxu0 %v493
        %v574 = vpop.f32.mrb[0].mxu0
        %v575 = vadd.f32 %v482, %v574
        %v576 = vpop.f32.mrb[0].mxu0
        %v577 = vadd.f32 %v491, %v576
        %v578 = vpop.f32.mrb[0].mxu0
        %v579 = vadd.f32 %v482, %v578
        %v580 = vpop.f32.mrb[0].mxu0
        %v581 = vadd.f32 %v491, %v580
        %582 = vmatprep.mubr.bf16.mxu0 0
        %583 = vmatmul.mubr.bf16.gmra.mrb[0].mxu0 %v496
        %v584 = vpop.f32.mrb[0].mxu0
        %v585 = vadd.f32 %v482, %v584
        %v586 = vpop.f32.mrb[0].mxu0
        %v587 = vadd.f32 %v491, %v586
        %v588 = vpop.f32.mrb[0].mxu0
        %v589 = vadd.f32 %v482, %v588
        %v590 = vpop.f32.mrb[0].mxu0
        %v591 = vadd.f32 %v491, %v590
        %592 = vmatprep.mubr.bf16.mxu0 0
        %593 = vmatmul.mubr.bf16.gmra.mrb[0].mxu0 %v499
        %v594 = vpop.f32.mrb[0].mxu0
        %v595 = vadd.f32 %v482, %v594
        %v596 = vpop.f32.mrb[0].mxu0
        %v597 = vadd.f32 %v491, %v596
        %v598 = vpop.f32.mrb[0].mxu0
        %v599 = vadd.f32 %v482, %v598
        %v600 = vpop.f32.mrb[0].mxu0
        %v601 = vadd.f32 %v491, %v600
        %602 = vmatprep.mubr.bf16.mxu0 0
        %603 = vmatmul.mubr.bf16.gmra.mrb[0].mxu0 %v502
        %v604 = vpop.f32.mrb[0].mxu0
        %v605 = vadd.f32 %v482, %v604
        %v606 = vpop.f32.mrb[0].mxu0
        %v607 = vadd.f32 %v491, %v606
        %v608 = vpop.f32.mrb[0].mxu0
        %v609 = vadd.f32 %v482, %v608
        %v610 = vpop.f32.mrb[0].mxu0
        %v611 = vadd.f32 %v491, %v610
        %612 = vmatprep.mubr.bf16.mxu0 0
        %613 = vmatmul.mubr.bf16.gmra.mrb[0].mxu0 %v505
        %v614 = vpop.f32.mrb[0].mxu0
        %v615 = vadd.f32 %v482, %v614
        %v616 = vpop.f32.mrb[0].mxu0
        %v617 = vadd.f32 %v491, %v616
        %v618 = vpop.f32.mrb[0].mxu0
        %v619 = vadd.f32 %v482, %v618
        %v620 = vpop.f32.mrb[0].mxu0
        %v621 = vadd.f32 %v491, %v620
        %622 = vmatprep.mubr.bf16.mxu0 0
        %623 = vmatmul.mubr.bf16.gmra.mrb[0].mxu0 %v508
        %v624 = vpop.f32.mrb[0].mxu0
        %v625 = vadd.f32 %v482, %v624
        %v626 = vpop.f32.mrb[0].mxu0
        %v627 = vadd.f32 %v491, %v626
        %v628 = vpop.f32.mrb[0].mxu0
        %v629 = vadd.f32 %v482, %v628
        %v630 = vpop.f32.mrb[0].mxu0
        %v631 = vadd.f32 %v491, %v630
        %632 = vmatprep.mubr.bf16.mxu0 0
        %633 = vmatmul.mubr.bf16.gmra.mrb[0].mxu0 %v511
        %v634 = vpop.f32.mrb[0].mxu0
        %v635 = vadd.f32 %v482, %v634
        %v636 = vpop.f32.mrb[0].mxu0
        %v637 = vadd.f32 %v491, %v636
        %v638 = vpop.f32.mrb[0].mxu0
        %v639 = vadd.f32 %v482, %v638
        %v640 = vpop.f32.mrb[0].mxu0
        %v641 = vadd.f32 %v491, %v640
        %642 = vmatprep.mubr.bf16.mxu0 0
        %643 = vmatmul.mubr.bf16.gmra.mrb[0].mxu0 %v514
        %v644 = vpop.f32.mrb[0].mxu0
        %v645 = vadd.f32 %v482, %v644
        %v646 = vpop.f32.mrb[0].mxu0
        %v647 = vadd.f32 %v491, %v646
        %v648 = vpop.f32.mrb[0].mxu0
        %v649 = vadd.f32 %v482, %v648
        %v650 = vpop.f32.mrb[0].mxu0
        %v651 = vadd.f32 %v491, %v650
        %652 = vmatprep.mubr.bf16.mxu0 0
        %653 = vmatmul.mubr.bf16.gmra.mrb[0].mxu0 %v517
        %v654 = vpop.f32.mrb[0].mxu0
        %v655 = vadd.f32 %v482, %v654
        %v656 = vpop.f32.mrb[0].mxu0
        %v657 = vadd.f32 %v491, %v656
        %v658 = vpop.f32.mrb[0].mxu0
        %v659 = vadd.f32 %v482, %v658
        %v660 = vpop.f32.mrb[0].mxu0
        %v661 = vadd.f32 %v491, %v660
        %662 = vmatprep.mubr.bf16.mxu0 0
        %663 = vmatmul.mubr.bf16.gmra.mrb[0].mxu0 %v520
        %v664 = vpop.f32.mrb[0].mxu0
        %v665 = vadd.f32 %v482, %v664
        %v666 = vpop.f32.mrb[0].mxu0
        %v667 = vadd.f32 %v491, %v666
        %v668 = vpop.f32.mrb[0].mxu0
        %v669 = vadd.f32 %v482, %v668
        %v670 = vpop.f32.mrb[0].mxu0
        %v671 = vadd.f32 %v491, %v670
        %672 = vmatprep.mubr.bf16.mxu0 0
        %673 = vmatmul.mubr.bf16.gmra.mrb[0].mxu0 %v523
        %v674 = vpop.f32.mrb[0].mxu0
        %v675 = vadd.f32 %v482, %v674
        %v676 = vpop.f32.mrb[0].mxu0
        %v677 = vadd.f32 %v491, %v676
        %v678 = vpop.f32.mrb[0].mxu0
        %v679 = vadd.f32 %v482, %v678
        %v680 = vpop.f32.mrb[0].mxu0
        %v681 = vadd.f32 %v491, %v680
        %682 = vmatprep.mubr.bf16.mxu0 0
        %683 = vmatmul.mubr.bf16.gmra.mrb[0].mxu0 %v526
        %v684 = vpop.f32.mrb[0].mxu0
        %v685 = vadd.f32 %v482, %v684
        %v686 = vpop.f32.mrb[0].mxu0
        %v687 = vadd.f32 %v491, %v686
        %v688 = vpop.f32.mrb[0].mxu0
        %v689 = vadd.f32 %v482, %v688
        %v690 = vpop.f32.mrb[0].mxu0
        %v691 = vadd.f32 %v491, %v690
        %692 = vmatprep.mubr.bf16.mxu0 0
        %693 = vmatmul.mubr.bf16.gmra.mrb[0].mxu0 %v529
        %v694 = vpop.f32.mrb[0].mxu0
        %v695 = vadd.f32 %v482, %v694
        %v696 = vpop.f32.mrb[0].mxu0
        %v697 = vadd.f32 %v491, %v696
        %v698 = vpop.f32.mrb[0].mxu0
        %v699 = vadd.f32 %v482, %v698
        %v700 = vpop.f32.mrb[0].mxu0
        %v701 = vadd.f32 %v491, %v700
        %702 = vmatprep.mubr.bf16.mxu0 0
        %703 = vmatmul.mubr.bf16.gmra.mrb[0].mxu0 %v532
        %v704 = vpop.f32.mrb[0].mxu0
        %v705 = vadd.f32 %v482, %v704
        %v706 = vpop.f32.mrb[0].mxu0
        %v707 = vadd.f32 %v491, %v706
        %v708 = vpop.f32.mrb[0].mxu0
        %v709 = vadd.f32 %v482, %v708
        %v710 = vpop.f32.mrb[0].mxu0
        %v711 = vadd.f32 %v491, %v710
        %712 = vmatprep.mubr.bf16.mxu0 0
        %713 = vmatmul.mubr.bf16.gmra.mrb[0].mxu0 %v535
        %v714 = vpop.f32.mrb[0].mxu0
        %v715 = vadd.f32 %v482, %v714
        %v716 = vpop.f32.mrb[0].mxu0
        %v717 = vadd.f32 %v491, %v716
        %v718 = vpop.f32.mrb[0].mxu0
        %v719 = vadd.f32 %v482, %v718
        %v720 = vpop.f32.mrb[0].mxu0
        %v721 = vadd.f32 %v491, %v720
        %722 = vmatprep.mubr.bf16.mxu0 0
        %723 = vmatmul.mubr.bf16.gmra.mrb[0].mxu0 %v538
        %v724 = vpop.f32.mrb[0].mxu0
        %v725 = vadd.f32 %v482, %v724
        %v726 = vpop.f32.mrb[0].mxu0
        %v727 = vadd.f32 %v491, %v726
        %v728 = vpop.f32.mrb[0].mxu0
        %v729 = vadd.f32 %v482, %v728
        %v730 = vpop.f32.mrb[0].mxu0
        %v731 = vadd.f32 %v491, %v730
        %732 = vdwg.mxu0
        %v733 = vmax.f32 %v575, %v577
        %734 = vmax.xlane.f32.xlu0 %v733
        %v735 = vpop.xlane.xlu0 %734
        %v736 = vmax.f32 %v579, %v581
        %737 = vmax.xlane.f32.xlu0 %v736
        %v738 = vpop.xlane.xlu0 %737
        %v739 = vmax.f32 %v585, %v587
        %740 = vmax.xlane.f32.xlu0 %v739
        %v741 = vpop.xlane.xlu0 %740
        %v742 = vmax.f32 %v589, %v591
        %743 = vmax.xlane.f32.xlu0 %v742
        %v744 = vpop.xlane.xlu0 %743
        %v745 = vmax.f32 %v595, %v597
        %746 = vmax.xlane.f32.xlu0 %v745
        %v747 = vpop.xlane.xlu0 %746
        %v748 = vmax.f32 %v599, %v601
        %749 = vmax.xlane.f32.xlu0 %v748
        %v750 = vpop.xlane.xlu0 %749
        %v751 = vmax.f32 %v605, %v607
        %752 = vmax.xlane.f32.xlu0 %v751
        %v753 = vpop.xlane.xlu0 %752
        %v754 = vmax.f32 %v609, %v611
        %755 = vmax.xlane.f32.xlu0 %v754
        %v756 = vpop.xlane.xlu0 %755
        %v757 = vmax.f32 %v615, %v617
        %758 = vmax.xlane.f32.xlu0 %v757
        %v759 = vpop.xlane.xlu0 %758
        %v760 = vmax.f32 %v619, %v621
        %761 = vmax.xlane.f32.xlu0 %v760
        %v762 = vpop.xlane.xlu0 %761
        %v763 = vmax.f32 %v625, %v627
        %764 = vmax.xlane.f32.xlu0 %v763
        %v765 = vpop.xlane.xlu0 %764
        %v766 = vmax.f32 %v629, %v631
        %767 = vmax.xlane.f32.xlu0 %v766
        %v768 = vpop.xlane.xlu0 %767
        %v769 = vmax.f32 %v635, %v637
        %770 = vmax.xlane.f32.xlu0 %v769
        %v771 = vpop.xlane.xlu0 %770
        %v772 = vmax.f32 %v639, %v641
        %773 = vmax.xlane.f32.xlu0 %v772
        %v774 = vpop.xlane.xlu0 %773
        %v775 = vmax.f32 %v645, %v647
        %776 = vmax.xlane.f32.xlu0 %v775
        %v777 = vpop.xlane.xlu0 %776
        %v778 = vmax.f32 %v649, %v651
        %779 = vmax.xlane.f32.xlu0 %v778
        %v780 = vpop.xlane.xlu0 %779
        %v781 = vmax.f32 %v655, %v657
        %782 = vmax.xlane.f32.xlu0 %v781
        %v783 = vpop.xlane.xlu0 %782
        %v784 = vmax.f32 %v659, %v661
        %785 = vmax.xlane.f32.xlu0 %v784
        %v786 = vpop.xlane.xlu0 %785
        %v787 = vmax.f32 %v665, %v667
        %788 = vmax.xlane.f32.xlu0 %v787
        %v789 = vpop.xlane.xlu0 %788
        %v790 = vmax.f32 %v669, %v671
        %791 = vmax.xlane.f32.xlu0 %v790
        %v792 = vpop.xlane.xlu0 %791
        %v793 = vmax.f32 %v675, %v677
        %794 = vmax.xlane.f32.xlu0 %v793
        %v795 = vpop.xlane.xlu0 %794
        %v796 = vmax.f32 %v679, %v681
        %797 = vmax.xlane.f32.xlu0 %v796
        %v798 = vpop.xlane.xlu0 %797
        %v799 = vmax.f32 %v685, %v687
        %800 = vmax.xlane.f32.xlu0 %v799
        %v801 = vpop.xlane.xlu0 %800
        %v802 = vmax.f32 %v689, %v691
        %803 = vmax.xlane.f32.xlu0 %v802
        %v804 = vpop.xlane.xlu0 %803
        %v805 = vmax.f32 %v695, %v697
        %806 = vmax.xlane.f32.xlu0 %v805
        %v807 = vpop.xlane.xlu0 %806
        %v808 = vmax.f32 %v699, %v701
        %809 = vmax.xlane.f32.xlu0 %v808
        %v810 = vpop.xlane.xlu0 %809
        %v811 = vmax.f32 %v705, %v707
        %812 = vmax.xlane.f32.xlu0 %v811
        %v813 = vpop.xlane.xlu0 %812
        %v814 = vmax.f32 %v709, %v711
        %815 = vmax.xlane.f32.xlu0 %v814
        %v816 = vpop.xlane.xlu0 %815
        %v817 = vmax.f32 %v715, %v717
        %818 = vmax.xlane.f32.xlu0 %v817
        %v819 = vpop.xlane.xlu0 %818
        %v820 = vmax.f32 %v719, %v721
        %821 = vmax.xlane.f32.xlu0 %v820
        %v822 = vpop.xlane.xlu0 %821
        %v823 = vmax.f32 %v725, %v727
        %824 = vmax.xlane.f32.xlu0 %v823
        %v825 = vpop.xlane.xlu0 %824
        %v826 = vmax.f32 %v729, %v731
        %827 = vmax.xlane.f32.xlu0 %v826
        %v828 = vpop.xlane.xlu0 %827
        %v829 = vsub.f32 %v575, %v735
        %v830 = vsub.f32 %v577, %v735
        %v831 = vsub.f32 %v579, %v738
        %v832 = vsub.f32 %v581, %v738
        %v833 = vsub.f32 %v585, %v741
        %v834 = vsub.f32 %v587, %v741
        %v835 = vsub.f32 %v589, %v744
        %v836 = vsub.f32 %v591, %v744
        %v837 = vsub.f32 %v595, %v747
        %v838 = vsub.f32 %v597, %v747
        %v839 = vsub.f32 %v599, %v750
        %v840 = vsub.f32 %v601, %v750
        %v841 = vsub.f32 %v605, %v753
        %v842 = vsub.f32 %v607, %v753
        %v843 = vsub.f32 %v609, %v756
        %v844 = vsub.f32 %v611, %v756
        %v845 = vsub.f32 %v615, %v759
        %v846 = vsub.f32 %v617, %v759
        %v847 = vsub.f32 %v619, %v762
        %v848 = vsub.f32 %v621, %v762
        %v849 = vsub.f32 %v625, %v765
        %v850 = vsub.f32 %v627, %v765
        %v851 = vsub.f32 %v629, %v768
        %v852 = vsub.f32 %v631, %v768
        %v853 = vsub.f32 %v635, %v771
        %v854 = vsub.f32 %v637, %v771
        %v855 = vsub.f32 %v639, %v774
        %v856 = vsub.f32 %v641, %v774
        %v857 = vsub.f32 %v645, %v777
        %v858 = vsub.f32 %v647, %v777
        %v859 = vsub.f32 %v649, %v780
        %v860 = vsub.f32 %v651, %v780
        %v861 = vsub.f32 %v655, %v783
        %v862 = vsub.f32 %v657, %v783
        %v863 = vsub.f32 %v659, %v786
        %v864 = vsub.f32 %v661, %v786
        %v865 = vsub.f32 %v665, %v789
        %v866 = vsub.f32 %v667, %v789
        %v867 = vsub.f32 %v669, %v792
        %v868 = vsub.f32 %v671, %v792
        %v869 = vsub.f32 %v675, %v795
        %v870 = vsub.f32 %v677, %v795
        %v871 = vsub.f32 %v679, %v798
        %v872 = vsub.f32 %v681, %v798
        %v873 = vsub.f32 %v685, %v801
        %v874 = vsub.f32 %v687, %v801
        %v875 = vsub.f32 %v689, %v804
        %v876 = vsub.f32 %v691, %v804
        %v877 = vsub.f32 %v695, %v807
        %v878 = vsub.f32 %v697, %v807
        %v879 = vsub.f32 %v699, %v810
        %v880 = vsub.f32 %v701, %v810
        %v881 = vsub.f32 %v705, %v813
        %v882 = vsub.f32 %v707, %v813
        %v883 = vsub.f32 %v709, %v816
        %v884 = vsub.f32 %v711, %v816
        %v885 = vsub.f32 %v715, %v819
        %v886 = vsub.f32 %v717, %v819
        %v887 = vsub.f32 %v719, %v822
        %v888 = vsub.f32 %v721, %v822
        %v889 = vsub.f32 %v725, %v825
        %v890 = vsub.f32 %v727, %v825
        %v891 = vsub.f32 %v729, %v828
        %v892 = vsub.f32 %v731, %v828
        %v893 = vmul.f32 %v829, 1.442695
        %v894 = vpow.pop %v893
        %v895 = vmul.f32 %v830, 1.442695
        %v896 = vpow.pop %v895
        %v897 = vmul.f32 %v831, 1.442695
        %v898 = vpow.pop %v897
        %v899 = vmul.f32 %v832, 1.442695
        %v900 = vpow.pop %v899
        %v901 = vmul.f32 %v833, 1.442695
        %v902 = vpow.pop %v901
        %v903 = vmul.f32 %v834, 1.442695
        %v904 = vpow.pop %v903
        %v905 = vmul.f32 %v835, 1.442695
        %v906 = vpow.pop %v905
        %v907 = vmul.f32 %v836, 1.442695
        %v908 = vpow.pop %v907
        %v909 = vmul.f32 %v837, 1.442695
        %v910 = vpow.pop %v909
        %v911 = vmul.f32 %v838, 1.442695
        %v912 = vpow.pop %v911
        %v913 = vmul.f32 %v839, 1.442695
        %v914 = vpow.pop %v913
        %v915 = vmul.f32 %v840, 1.442695
        %v916 = vpow.pop %v915
        %v917 = vmul.f32 %v841, 1.442695
        %v918 = vpow.pop %v917
        %v919 = vmul.f32 %v842, 1.442695
        %v920 = vpow.pop %v919
        %v921 = vmul.f32 %v843, 1.442695
        %v922 = vpow.pop %v921
        %v923 = vmul.f32 %v844, 1.442695
        %v924 = vpow.pop %v923
        %v925 = vmul.f32 %v845, 1.442695
        %v926 = vpow.pop %v925
        %v927 = vmul.f32 %v846, 1.442695
        %v928 = vpow.pop %v927
        %v929 = vmul.f32 %v847, 1.442695
        %v930 = vpow.pop %v929
        %v931 = vmul.f32 %v848, 1.442695
        %v932 = vpow.pop %v931
        %v933 = vmul.f32 %v849, 1.442695
        %v934 = vpow.pop %v933
        %v935 = vmul.f32 %v850, 1.442695
        %v936 = vpow.pop %v935
        %v937 = vmul.f32 %v851, 1.442695
        %v938 = vpow.pop %v937
        %v939 = vmul.f32 %v852, 1.442695
        %v940 = vpow.pop %v939
        %v941 = vmul.f32 %v853, 1.442695
        %v942 = vpow.pop %v941
        %v943 = vmul.f32 %v854, 1.442695
        %v944 = vpow.pop %v943
        %v945 = vmul.f32 %v855, 1.442695
        %v946 = vpow.pop %v945
        %v947 = vmul.f32 %v856, 1.442695
        %v948 = vpow.pop %v947
        %v949 = vmul.f32 %v857, 1.442695
        %v950 = vpow.pop %v949
        %v951 = vmul.f32 %v858, 1.442695
        %v952 = vpow.pop %v951
        %v953 = vmul.f32 %v859, 1.442695
        %v954 = vpow.pop %v953
        %v955 = vmul.f32 %v860, 1.442695
        %v956 = vpow.pop %v955
        %v957 = vmul.f32 %v861, 1.442695
        %v958 = vpow.pop %v957
        %v959 = vmul.f32 %v862, 1.442695
        %v960 = vpow.pop %v959
        %v961 = vmul.f32 %v863, 1.442695
        %v962 = vpow.pop %v961
        %v963 = vmul.f32 %v864, 1.442695
        %v964 = vpow.pop %v963
        %v965 = vmul.f32 %v865, 1.442695
        %v966 = vpow.pop %v965
        %v967 = vmul.f32 %v866, 1.442695
        %v968 = vpow.pop %v967
        %v969 = vmul.f32 %v867, 1.442695
        %v970 = vpow.pop %v969
        %v971 = vmul.f32 %v868, 1.442695
        %v972 = vpow.pop %v971
        %v973 = vmul.f32 %v869, 1.442695
        %v974 = vpow.pop %v973
        %v975 = vmul.f32 %v870, 1.442695
        %v976 = vpow.pop %v975
        %v977 = vmul.f32 %v871, 1.442695
        %v978 = vpow.pop %v977
        %v979 = vmul.f32 %v872, 1.442695
        %v980 = vpow.pop %v979
        %v981 = vmul.f32 %v873, 1.442695
        %v982 = vpow.pop %v981
        %v983 = vmul.f32 %v874, 1.442695
        %v984 = vpow.pop %v983
        %v985 = vmul.f32 %v875, 1.442695
        %v986 = vpow.pop %v985
        %v987 = vmul.f32 %v876, 1.442695
        %v988 = vpow.pop %v987
        %v989 = vmul.f32 %v877, 1.442695
        %v990 = vpow.pop %v989
        %v991 = vmul.f32 %v878, 1.442695
        %v992 = vpow.pop %v991
        %v993 = vmul.f32 %v879, 1.442695
        %v994 = vpow.pop %v993
        %v995 = vmul.f32 %v880, 1.442695
        %v996 = vpow.pop %v995
        %v997 = vmul.f32 %v881, 1.442695
        %v998 = vpow.pop %v997
        %v999 = vmul.f32 %v882, 1.442695
        %v1000 = vpow.pop %v999
        %v1001 = vmul.f32 %v883, 1.442695
        %v1002 = vpow.pop %v1001
        %v1003 = vmul.f32 %v884, 1.442695
        %v1004 = vpow.pop %v1003
        %v1005 = vmul.f32 %v885, 1.442695
        %v1006 = vpow.pop %v1005
        %v1007 = vmul.f32 %v886, 1.442695
        %v1008 = vpow.pop %v1007
        %v1009 = vmul.f32 %v887, 1.442695
        %v1010 = vpow.pop %v1009
        %v1011 = vmul.f32 %v888, 1.442695
        %v1012 = vpow.pop %v1011
        %v1013 = vmul.f32 %v889, 1.442695
        %v1014 = vpow.pop %v1013
        %v1015 = vmul.f32 %v890, 1.442695
        %v1016 = vpow.pop %v1015
        %v1017 = vmul.f32 %v891, 1.442695
        %v1018 = vpow.pop %v1017
        %v1019 = vmul.f32 %v892, 1.442695
        %v1020 = vpow.pop %v1019
        %v1021 = vadd.f32 %v894, %v896
        %1022 = vadd.xlane.f32.xlu0 %v1021
        %v1023 = vpop.xlane.xlu0 %1022
        %v1024 = vadd.f32 %v898, %v900
        %1025 = vadd.xlane.f32.xlu0 %v1024
        %v1026 = vpop.xlane.xlu0 %1025
        %v1027 = vadd.f32 %v902, %v904
        %1028 = vadd.xlane.f32.xlu0 %v1027
        %v1029 = vpop.xlane.xlu0 %1028
        %v1030 = vadd.f32 %v906, %v908
        %1031 = vadd.xlane.f32.xlu0 %v1030
        %v1032 = vpop.xlane.xlu0 %1031
        %v1033 = vadd.f32 %v910, %v912
        %1034 = vadd.xlane.f32.xlu0 %v1033
        %v1035 = vpop.xlane.xlu0 %1034
        %v1036 = vadd.f32 %v914, %v916
        %1037 = vadd.xlane.f32.xlu0 %v1036
        %v1038 = vpop.xlane.xlu0 %1037
        %v1039 = vadd.f32 %v918, %v920
        %1040 = vadd.xlane.f32.xlu0 %v1039
        %v1041 = vpop.xlane.xlu0 %1040
        %v1042 = vadd.f32 %v922, %v924
        %1043 = vadd.xlane.f32.xlu0 %v1042
        %v1044 = vpop.xlane.xlu0 %1043
        %v1045 = vadd.f32 %v926, %v928
        %1046 = vadd.xlane.f32.xlu0 %v1045
        %v1047 = vpop.xlane.xlu0 %1046
        %v1048 = vadd.f32 %v930, %v932
        %1049 = vadd.xlane.f32.xlu0 %v1048
        %v1050 = vpop.xlane.xlu0 %1049
        %v1051 = vadd.f32 %v934, %v936
        %1052 = vadd.xlane.f32.xlu0 %v1051
        %v1053 = vpop.xlane.xlu0 %1052
        %v1054 = vadd.f32 %v938, %v940
        %1055 = vadd.xlane.f32.xlu0 %v1054
        %v1056 = vpop.xlane.xlu0 %1055
        %v1057 = vadd.f32 %v942, %v944
        %1058 = vadd.xlane.f32.xlu0 %v1057
        %v1059 = vpop.xlane.xlu0 %1058
        %v1060 = vadd.f32 %v946, %v948
        %1061 = vadd.xlane.f32.xlu0 %v1060
        %v1062 = vpop.xlane.xlu0 %1061
        %v1063 = vadd.f32 %v950, %v952
        %1064 = vadd.xlane.f32.xlu0 %v1063
        %v1065 = vpop.xlane.xlu0 %1064
        %v1066 = vadd.f32 %v954, %v956
        %1067 = vadd.xlane.f32.xlu0 %v1066
        %v1068 = vpop.xlane.xlu0 %1067
        %v1069 = vadd.f32 %v958, %v960
        %1070 = vadd.xlane.f32.xlu0 %v1069
        %v1071 = vpop.xlane.xlu0 %1070
        %v1072 = vadd.f32 %v962, %v964
        %1073 = vadd.xlane.f32.xlu0 %v1072
        %v1074 = vpop.xlane.xlu0 %1073
        %v1075 = vadd.f32 %v966, %v968
        %1076 = vadd.xlane.f32.xlu0 %v1075
        %v1077 = vpop.xlane.xlu0 %1076
        %v1078 = vadd.f32 %v970, %v972
        %1079 = vadd.xlane.f32.xlu0 %v1078
        %v1080 = vpop.xlane.xlu0 %1079
        %v1081 = vadd.f32 %v974, %v976
        %1082 = vadd.xlane.f32.xlu0 %v1081
        %v1083 = vpop.xlane.xlu0 %1082
        %v1084 = vadd.f32 %v978, %v980
        %1085 = vadd.xlane.f32.xlu0 %v1084
        %v1086 = vpop.xlane.xlu0 %1085
        %v1087 = vadd.f32 %v982, %v984
        %1088 = vadd.xlane.f32.xlu0 %v1087
        %v1089 = vpop.xlane.xlu0 %1088
        %v1090 = vadd.f32 %v986, %v988
        %1091 = vadd.xlane.f32.xlu0 %v1090
        %v1092 = vpop.xlane.xlu0 %1091
        %v1093 = vadd.f32 %v990, %v992
        %1094 = vadd.xlane.f32.xlu0 %v1093
        %v1095 = vpop.xlane.xlu0 %1094
        %v1096 = vadd.f32 %v994, %v996
        %1097 = vadd.xlane.f32.xlu0 %v1096
        %v1098 = vpop.xlane.xlu0 %1097
        %v1099 = vadd.f32 %v998, %v1000
        %1100 = vadd.xlane.f32.xlu0 %v1099
        %v1101 = vpop.xlane.xlu0 %1100
        %v1102 = vadd.f32 %v1002, %v1004
        %1103 = vadd.xlane.f32.xlu0 %v1102
        %v1104 = vpop.xlane.xlu0 %1103
        %v1105 = vadd.f32 %v1006, %v1008
        %1106 = vadd.xlane.f32.xlu0 %v1105
        %v1107 = vpop.xlane.xlu0 %1106
        %v1108 = vadd.f32 %v1010, %v1012
        %1109 = vadd.xlane.f32.xlu0 %v1108
        %v1110 = vpop.xlane.xlu0 %1109
        %v1111 = vadd.f32 %v1014, %v1016
        %1112 = vadd.xlane.f32.xlu0 %v1111
        %v1113 = vpop.xlane.xlu0 %1112
        %v1114 = vadd.f32 %v1018, %v1020
        %1115 = vadd.xlane.f32.xlu0 %v1114
        %v1116 = vpop.xlane.xlu0 %1115
        %v1117 = vrcp.pop %v1023
        %v1118 = vrcp.pop %v1026
        %v1119 = vrcp.pop %v1029
        %v1120 = vrcp.pop %v1032
        %v1121 = vrcp.pop %v1035
        %v1122 = vrcp.pop %v1038
        %v1123 = vrcp.pop %v1041
        %v1124 = vrcp.pop %v1044
        %v1125 = vrcp.pop %v1047
        %v1126 = vrcp.pop %v1050
        %v1127 = vrcp.pop %v1053
        %v1128 = vrcp.pop %v1056
        %v1129 = vrcp.pop %v1059
        %v1130 = vrcp.pop %v1062
        %v1131 = vrcp.pop %v1065
        %v1132 = vrcp.pop %v1068
        %v1133 = vrcp.pop %v1071
        %v1134 = vrcp.pop %v1074
        %v1135 = vrcp.pop %v1077
        %v1136 = vrcp.pop %v1080
        %v1137 = vrcp.pop %v1083
        %v1138 = vrcp.pop %v1086
        %v1139 = vrcp.pop %v1089
        %v1140 = vrcp.pop %v1092
        %v1141 = vrcp.pop %v1095
        %v1142 = vrcp.pop %v1098
        %v1143 = vrcp.pop %v1101
        %v1144 = vrcp.pop %v1104
        %v1145 = vrcp.pop %v1107
        %v1146 = vrcp.pop %v1110
        %v1147 = vrcp.pop %v1113
        %v1148 = vrcp.pop %v1116
        %v1149 = vmul.f32 %v894, %v1117
        %v1150 = vmul.f32 %v896, %v1117
        %v1151 = vmul.f32 %v898, %v1118
        %v1152 = vmul.f32 %v900, %v1118
        %v1153 = vmul.f32 %v902, %v1119
        %v1154 = vmul.f32 %v904, %v1119
        %v1155 = vmul.f32 %v906, %v1120
        %v1156 = vmul.f32 %v908, %v1120
        %v1157 = vmul.f32 %v910, %v1121
        %v1158 = vmul.f32 %v912, %v1121
        %v1159 = vmul.f32 %v914, %v1122
        %v1160 = vmul.f32 %v916, %v1122
        %v1161 = vmul.f32 %v918, %v1123
        %v1162 = vmul.f32 %v920, %v1123
        %v1163 = vmul.f32 %v922, %v1124
        %v1164 = vmul.f32 %v924, %v1124
        %v1165 = vmul.f32 %v926, %v1125
        %v1166 = vmul.f32 %v928, %v1125
        %v1167 = vmul.f32 %v930, %v1126
        %v1168 = vmul.f32 %v932, %v1126
        %v1169 = vmul.f32 %v934, %v1127
        %v1170 = vmul.f32 %v936, %v1127
        %v1171 = vmul.f32 %v938, %v1128
        %v1172 = vmul.f32 %v940, %v1128
        %v1173 = vmul.f32 %v942, %v1129
        %v1174 = vmul.f32 %v944, %v1129
        %v1175 = vmul.f32 %v946, %v1130
        %v1176 = vmul.f32 %v948, %v1130
        %v1177 = vmul.f32 %v950, %v1131
        %v1178 = vmul.f32 %v952, %v1131
        %v1179 = vmul.f32 %v954, %v1132
        %v1180 = vmul.f32 %v956, %v1132
        %v1181 = vmul.f32 %v958, %v1133
        %v1182 = vmul.f32 %v960, %v1133
        %v1183 = vmul.f32 %v962, %v1134
        %v1184 = vmul.f32 %v964, %v1134
        %v1185 = vmul.f32 %v966, %v1135
        %v1186 = vmul.f32 %v968, %v1135
        %v1187 = vmul.f32 %v970, %v1136
        %v1188 = vmul.f32 %v972, %v1136
        %v1189 = vmul.f32 %v974, %v1137
        %v1190 = vmul.f32 %v976, %v1137
        %v1191 = vmul.f32 %v978, %v1138
        %v1192 = vmul.f32 %v980, %v1138
        %v1193 = vmul.f32 %v982, %v1139
        %v1194 = vmul.f32 %v984, %v1139
        %v1195 = vmul.f32 %v986, %v1140
        %v1196 = vmul.f32 %v988, %v1140
        %v1197 = vmul.f32 %v990, %v1141
        %v1198 = vmul.f32 %v992, %v1141
        %v1199 = vmul.f32 %v994, %v1142
        %v1200 = vmul.f32 %v996, %v1142
        %v1201 = vmul.f32 %v998, %v1143
        %v1202 = vmul.f32 %v1000, %v1143
        %v1203 = vmul.f32 %v1002, %v1144
        %v1204 = vmul.f32 %v1004, %v1144
        %v1205 = vmul.f32 %v1006, %v1145
        %v1206 = vmul.f32 %v1008, %v1145
        %v1207 = vmul.f32 %v1010, %v1146
        %v1208 = vmul.f32 %v1012, %v1146
        %v1209 = vmul.f32 %v1014, %v1147
        %v1210 = vmul.f32 %v1016, %v1147
        %v1211 = vmul.f32 %v1018, %v1148
        %v1212 = vmul.f32 %v1020, %v1148
        %v1213 = vld [vmem:[%s4] sm:$0xf]
        %v1214 = vld [vmem:[%s4 + $0x4] sm:$0xf]
        %v1215 = vld [vmem:[%s4 + $0x8] sm:$0xf]
        %v1216 = vld [vmem:[%s4 + $0xc] sm:$0xf]
        %v1217 = vld [vmem:[%s5] sm:$0xff]
        %v1218 = vld [vmem:[%s5 + $0x8] sm:$0xff]
        %v1219 = vld [vmem:[%s5 + $0x10] sm:$0xff]
        %v1220 = vld [vmem:[%s5 + $0x18] sm:$0xff]
        %1222 = vset.pattern.permute.xlu0 0
        %1223 = vperm.xlu0 %1222, %v1217
        %v1224 = vpop.permute.xlu0 %1223
        %1227 = vset.pattern.permute.xlu0 0
        %1228 = vperm.xlu0 %1227, %v1218
        %v1229 = vpop.permute.xlu0 %1228
        %1232 = vset.pattern.permute.xlu0 0
        %1233 = vperm.xlu0 %1232, %v1219
        %v1234 = vpop.permute.xlu0 %1233
        %1237 = vset.pattern.permute.xlu0 0
        %1238 = vperm.xlu0 %1237, %v1220
        %v1239 = vpop.permute.xlu0 %1238
        %v1245 = vunpack.c.l.b16 %v1213
        %v1246 = vunpack.c.l.b16 %v1214
        %v1247 = vunpack.c.l.b16 %v1215
        %v1248 = vunpack.c.l.b16 %v1216
        %v1249 = vpack.c.b16 %v1246, %v1245
        %v1250 = vpack.c.b16 %v1248, %v1247
        %v1252 = vsel %vm378, %v1249, 0
        %v1255 = vsel %vm378, %v1250, 0
        %1257 = vmatprep.subr.bf16.mxu0 %v281
        %1258 = vmatpush1.bf16.msra.mxu0 %v280
        %1259 = vmatprep.subr.bf16.mxu0 %v283
        %1260 = vmatpush1.bf16.msra.mxu0 %v282
        %1261 = vmatprep.subr.bf16.mxu0 0
        %1262 = vmatpush1.bf16.msra.mxu0 0
        %1263 = vmatprep.subr.bf16.mxu0 0
        %1264 = vmatpush1.bf16.msra.mxu0 0
        %1265 = vmatprep.subr.bf16.mxu0 0
        %1266 = vmatpush1.bf16.msra.mxu0 0
        %1267 = vmatprep.subr.bf16.mxu0 0
        %1268 = vmatpush1.bf16.msra.mxu0 0
        %1269 = vmatprep.subr.bf16.mxu0 0
        %1270 = vmatpush1.bf16.msra.mxu0 0
        %1271 = vmatprep.subr.bf16.mxu0 0
        %1272 = vmatpush1.bf16.msra.mxu0 0
        %1273 = vmatprep.subr.bf16.mxu0 0
        %1274 = vmatpush1.bf16.msra.mxu0 0
        %1275 = vmatprep.subr.bf16.mxu0 0
        %1276 = vmatpush1.bf16.msra.mxu0 0
        %1277 = vmatprep.subr.bf16.mxu0 0
        %1278 = vmatpush1.bf16.msra.mxu0 0
        %1279 = vmatprep.subr.bf16.mxu0 0
        %1280 = vmatpush1.bf16.msra.mxu0 0
        %1281 = vmatprep.subr.bf16.mxu0 0
        %1282 = vmatpush1.bf16.msra.mxu0 0
        %1283 = vmatprep.subr.bf16.mxu0 0
        %1284 = vmatpush1.bf16.msra.mxu0 0
        %1285 = vmatprep.subr.bf16.mxu0 0
        %1286 = vmatpush1.bf16.msra.mxu0 0
        %1287 = vmatprep.subr.bf16.mxu0 0
        %1288 = vmatpush1.bf16.msra.mxu0 0
        %1289 = vmatprep.mubr.bf16.mxu0 0
        %1290 = vmatmul.mubr.bf16.gmra.mrb[0].mxu0 %v1252
        %v1291 = vpop.f32.mrb[0].mxu0
        %v1292 = vadd.f32 %v1224, %v1291
        %v1293 = vpop.f32.mrb[0].mxu0
        %v1294 = vadd.f32 %v1224, %v1293
        %v1295 = vpop.f32.mrb[0].mxu0
        %v1296 = vadd.f32 %v1229, %v1295
        %v1297 = vpop.f32.mrb[0].mxu0
        %v1298 = vadd.f32 %v1229, %v1297
        %1299 = vmatprep.mubr.bf16.mxu0 0
        %1300 = vmatmul.mubr.bf16.gmra.mrb[0].mxu0 %v1255
        %v1301 = vpop.f32.mrb[0].mxu0
        %v1302 = vadd.f32 %v1234, %v1301
        %v1303 = vpop.f32.mrb[0].mxu0
        %v1304 = vadd.f32 %v1234, %v1303
        %v1305 = vpop.f32.mrb[0].mxu0
        %v1306 = vadd.f32 %v1239, %v1305
        %v1307 = vpop.f32.mrb[0].mxu0
        %v1308 = vadd.f32 %v1239, %v1307
        %1309 = vdwg.mxu0
        %v1310 = vpack.c.bf16 %v1296, %v1292
        %v1311 = vpack.c.bf16 %v1298, %v1294
        %v1312 = vpack.c.bf16 %v1306, %v1302
        %v1313 = vpack.c.bf16 %v1308, %v1304
        %v1314 = vpack.c.bf16 %v1151, %v1149
        %v1315 = vpack.c.bf16 %v1152, %v1150
        %v1316 = vpack.c.bf16 %v1155, %v1153
        %v1317 = vpack.c.bf16 %v1156, %v1154
        %v1318 = vpack.c.bf16 %v1159, %v1157
        %v1319 = vpack.c.bf16 %v1160, %v1158
        %v1320 = vpack.c.bf16 %v1163, %v1161
        %v1321 = vpack.c.bf16 %v1164, %v1162
        %v1322 = vpack.c.bf16 %v1167, %v1165
        %v1323 = vpack.c.bf16 %v1168, %v1166
        %v1324 = vpack.c.bf16 %v1171, %v1169
        %v1325 = vpack.c.bf16 %v1172, %v1170
        %v1326 = vpack.c.bf16 %v1175, %v1173
        %v1327 = vpack.c.bf16 %v1176, %v1174
        %v1328 = vpack.c.bf16 %v1179, %v1177
        %v1329 = vpack.c.bf16 %v1180, %v1178
        %v1330 = vpack.c.bf16 %v1183, %v1181
        %v1331 = vpack.c.bf16 %v1184, %v1182
        %v1332 = vpack.c.bf16 %v1187, %v1185
        %v1333 = vpack.c.bf16 %v1188, %v1186
        %v1334 = vpack.c.bf16 %v1191, %v1189
        %v1335 = vpack.c.bf16 %v1192, %v1190
        %v1336 = vpack.c.bf16 %v1195, %v1193
        %v1337 = vpack.c.bf16 %v1196, %v1194
        %v1338 = vpack.c.bf16 %v1199, %v1197
        %v1339 = vpack.c.bf16 %v1200, %v1198
        %v1340 = vpack.c.bf16 %v1203, %v1201
        %v1341 = vpack.c.bf16 %v1204, %v1202
        %v1342 = vpack.c.bf16 %v1207, %v1205
        %v1343 = vpack.c.bf16 %v1208, %v1206
        %v1344 = vpack.c.bf16 %v1211, %v1209
        %v1345 = vpack.c.bf16 %v1212, %v1210
        %1346 = vmatprep.subr.bf16.mxu0 %v1315
        %1347 = vmatpush1.bf16.xpose.msra.mxu0 %v1314
        %1348 = vmatprep.subr.bf16.mxu0 %v1317
        %1349 = vmatpush1.bf16.xpose.msra.mxu0 %v1316
        %1350 = vmatprep.subr.bf16.mxu0 %v1319
        %1351 = vmatpush1.bf16.xpose.msra.mxu0 %v1318
        %1352 = vmatprep.subr.bf16.mxu0 %v1321
        %1353 = vmatpush1.bf16.xpose.msra.mxu0 %v1320
        %1354 = vmatprep.subr.bf16.mxu0 %v1323
        %1355 = vmatpush1.bf16.xpose.msra.mxu0 %v1322
        %1356 = vmatprep.subr.bf16.mxu0 %v1325
        %1357 = vmatpush1.bf16.xpose.msra.mxu0 %v1324
        %1358 = vmatprep.subr.bf16.mxu0 %v1327
        %1359 = vmatpush1.bf16.xpose.msra.mxu0 %v1326
        %1360 = vmatprep.subr.bf16.mxu0 %v1329
        %1361 = vmatpush1.bf16.xpose.msra.mxu0 %v1328
        %1362 = vmatprep.subr.bf16.mxu0 %v1331
        %1363 = vmatpush1.bf16.xpose.msra.mxu0 %v1330
        %1364 = vmatprep.subr.bf16.mxu0 %v1333
        %1365 = vmatpush1.bf16.xpose.msra.mxu0 %v1332
        %1366 = vmatprep.subr.bf16.mxu0 %v1335
        %1367 = vmatpush1.bf16.xpose.msra.mxu0 %v1334
        %1368 = vmatprep.subr.bf16.mxu0 %v1337
        %1369 = vmatpush1.bf16.xpose.msra.mxu0 %v1336
        %1370 = vmatprep.subr.bf16.mxu0 %v1339
        %1371 = vmatpush1.bf16.xpose.msra.mxu0 %v1338
        %1372 = vmatprep.subr.bf16.mxu0 %v1341
        %1373 = vmatpush1.bf16.xpose.msra.mxu0 %v1340
        %1374 = vmatprep.subr.bf16.mxu0 %v1343
        %1375 = vmatpush1.bf16.xpose.msra.mxu0 %v1342
        %1376 = vmatprep.subr.bf16.mxu0 %v1345
        %1377 = vmatpush1.bf16.xpose.msra.mxu0 %v1344
        %1378 = vmatprep.mubr.bf16.mxu0 %v1311
        %1379 = vmatmul.mubr.bf16.gmra.mrb[0].mxu0 %v1310
        %v1380 = vpop.f32.mrb[0].mxu0
        %v1381 = vadd.f32 0.0, %v1380
        %v1382 = vpop.f32.mrb[0].mxu0
        %v1383 = vadd.f32 0.0, %v1382
        %v1384 = vpop.f32.mrb[0].mxu0
        %v1385 = vadd.f32 0.0, %v1384
        %v1386 = vpop.f32.mrb[0].mxu0
        %v1387 = vadd.f32 0.0, %v1386
        %1388 = vmatprep.mubr.bf16.mxu0 %v1313
        %1389 = vmatmul.mubr.bf16.gmra.mrb[0].mxu0 %v1312
        %v1390 = vpop.f32.mrb[0].mxu0
        %v1391 = vadd.f32 0.0, %v1390
        %v1392 = vpop.f32.mrb[0].mxu0
        %v1393 = vadd.f32 0.0, %v1392
        %v1394 = vpop.f32.mrb[0].mxu0
        %v1395 = vadd.f32 0.0, %v1394
        %v1396 = vpop.f32.mrb[0].mxu0
        %v1397 = vadd.f32 0.0, %v1396
        %1398 = vdwg.mxu0
        %s1399 = sld [smem:[#allocation2]]
        %v1400 = vstv %s1399
        %v1401 = vmul.f32 %v1400, %v1381
        %v1402 = vmul.f32 %v1400, %v1383
        %v1403 = vmul.f32 %v1400, %v1385
        %v1404 = vmul.f32 %v1400, %v1387
        %v1405 = vmul.f32 %v1400, %v1391
        %v1406 = vmul.f32 %v1400, %v1393
        %v1407 = vmul.f32 %v1400, %v1395
        %v1408 = vmul.f32 %v1400, %v1397
        %v1409 = vadd.f32 %v1401, %v272
        %v1410 = vadd.f32 %v1402, %v273
        %v1411 = vadd.f32 %v1403, %v274
        %v1412 = vadd.f32 %v1404, %v275
        %v1413 = vadd.f32 %v1405, %v276
        %v1414 = vadd.f32 %v1406, %v277
        %v1415 = vadd.f32 %v1407, %v278
        %v1416 = vadd.f32 %v1408, %v279
        %1417 = vst [vmem:[%s270] sm:$0xff] %v1409
        %1418 = vst [vmem:[%s270 + $0x8] sm:$0xff] %v1410
        %1419 = vst [vmem:[%s270 + $0x10] sm:$0xff] %v1411
        %1420 = vst [vmem:[%s270 + $0x18] sm:$0xff] %v1412
        %1421 = vst [vmem:[%s270 + $0x20] sm:$0xff] %v1413
        %1422 = vst [vmem:[%s270 + $0x28] sm:$0xff] %v1414
        %1423 = vst [vmem:[%s270 + $0x30] sm:$0xff] %v1415
        %1424 = vst [vmem:[%s270 + $0x38] sm:$0xff] %v1416
        %s1425 = sand.u32 %s163, 1
        %s1426 = scalar_lea.sflag [#allocation5], %s1425
        %s1427 = sand.u32 %s163, 1
        %s1428 = smul.addr %s1427, 64
        %s1429 = scalar_lea.vmem [#allocation6], %s1428
        // Predicated region
        $region49: #{tpu_custom_call.1} parent=43 // pred_check
          %p1430 = pneg %p173
        $region50: #{tpu_custom_call.1} parent=43 // pred_check_branch
          %1432 = sbr.rel (%p1430) target = $region52
        $region51: #{tpu_custom_call.1} parent=43 // pred_region
          %s1434 = ssub.s32 1024, 1024
          %1435 = vsyncadd %s1426, %s1434
          %s1436 = smul.addr %s24, 8
          %s1437 = smul.addr %s1436, 128
          %s1438 = scalar_lea.hbm %s6, %s1437
          %s1439 = sshll.u32 %s1429, 4
          %s1440 = int_to_ptr.vmem [resolvable:$true] %s1439
          %1445 = dma.vmem_to_hbm [thread:$0]  %s1440, 1024, %s1438, %s1426, 256, 256, 16
        $region52: #{tpu_custom_call.1} parent=43 // pred_fallthru
          _
      $region44: #{tpu_custom_call.1} parent=5 // pred_fallthru
        _
      %p1446 = scmp.le.s32.totalorder 2, %s19
      // Predicated region
      $region53: #{tpu_custom_call.1} parent=5 // pred_check
        %p1447 = pneg %p1446
      $region54: #{tpu_custom_call.1} parent=5 // pred_check_branch
        %1449 = sbr.rel (%p1447) target = $region56
      $region55: #{tpu_custom_call.1} parent=5 // pred_region
        %s1450 = ssub.s32 %s19, 2
        // Predicated region
        $region57: #{tpu_custom_call.1} parent=55 // pred_check
          %p1451 = pneg %p179
        $region58: #{tpu_custom_call.1} parent=55 // pred_check_branch
          %1453 = sbr.rel (%p1451) target = $region60
        $region59: #{tpu_custom_call.1} parent=55 // pred_region
          %s1454 = sand.u32 %s164, 1
          %s1455 = scalar_lea.sflag [#allocation5], %s1454
          %s1456 = sand.u32 %s164, 1
          %s1457 = smul.addr %s1456, 64
          %s1458 = scalar_lea.vmem [#allocation6], %s1457
          %1459 = dma.done %s1455, 1024
        $region60: #{tpu_custom_call.1} parent=55 // pred_fallthru
          _
      $region56: #{tpu_custom_call.1} parent=5 // pred_fallthru
        _
    $region6: #{tpu_custom_call.1} parent=1 // loop_footer
      %s23 = sadd.s32 1, %s19
    $region7: #{tpu_custom_call.1} parent=1 // loop_footer_branch
      %18 = sbr.rel target = $region3
    $region8: #{tpu_custom_call.1} parent=1 // loop_exit
      _
    %1460 = vsyncpa [#allocation4], 1
    %s1461 = scalar_lea.sflag [#allocation4], 1
    %1462 = vsyncpa %s1461, 1
    %1463 = vsyncpa [#allocation5], 1
    %s1464 = scalar_lea.sflag [#allocation5], 1
    %1465 = vsyncpa %s1464, 1

</llo_original>
